<compile_context>
chip_gen: v7x
topology: tpu7x:2x2x1
jax: 0.10.0
libtpu: 0.0.40
codegen_flags: <defaults>
</compile_context>

<pallas_src>
import functools

import numpy as np
import jax
import jax.numpy as jnp
from jax import lax
from jax.experimental import pallas as pl
from jax.experimental.pallas import tpu as pltpu


# ---------------------------------------------------------------------------
# Fused Pallas kernel
# ---------------------------------------------------------------------------
def _shift_cols(a, k):
    """b[:, s] = a[:, s + k] (zero fill out of range); k is a static Python int."""
    c, m = a.shape
    if k == 0:
        return a
    if k > 0:
        return jnp.concatenate([a[:, k:], jnp.zeros((c, k), a.dtype)], axis=1)
    return jnp.concatenate([jnp.zeros((c, -k), a.dtype), a[:, :k]], axis=1)


def _resnet_kernel(x_ref, m1_ref, m2_ref, sel_ref, avg_ref,
                   w1_ref, b1_ref, w2a_ref, b2a_ref, w2b_ref, b2b_ref,
                   fcw_ref, fcb_ref,
                   logits_ref, feat_ref, pool_ref,
                   slab1_ref, slab2_ref,
                   *, n, h, w, c):
    f32, bf16 = jnp.float32, jnp.bfloat16
    ho, wo = h // 2, w // 2
    offs1 = [di * w + dj for di in (-1, 0, 1) for dj in (-1, 0, 1)]
    offs2 = [di * wo + dj for di in (-1, 0, 1) for dj in (-1, 0, 1)]

    # ---- conv1 (Cin=1) + folded BN + ReLU, channels-major (C, M) layout ------
    # Masked 9-tap slab staged in VMEM scratch (masks are hoisted host constants),
    # then ONE MXU matmul instead of 9 VPU rank-1 updates.
    x = x_ref[...]                                       # (1, n*h*w) f32
    for k, o in enumerate(offs1):
        slab1_ref[k:k + 1, :] = _shift_cols(x, o) * m1_ref[k:k + 1, :]
    y1 = jnp.dot(w1_ref[...], slab1_ref[...].astype(bf16),
                 preferred_element_type=f32) + b1_ref[...]
    y1 = jnp.maximum(y1, 0.0)                            # (c, n*h*w)

    # ---- maxpool 2x2 stride 2: shifted max + hoisted one-hot matmul ----------
    # (cross-boundary lanes of the shifted max are discarded by the one-hot sel)
    mx = jnp.maximum(jnp.maximum(y1, _shift_cols(y1, 1)),
                     jnp.maximum(_shift_cols(y1, w), _shift_cols(y1, w + 1)))
    a0 = jnp.dot(mx.astype(bf16), sel_ref[...], preferred_element_type=f32)  # (c, m2)

    # ---- BasicBlock: conv/bn/relu -> conv/bn -> +identity -> relu -------------
    # 9 taps fused into a single (c, 9c) x (9c, m2) MXU matmul per conv; the
    # (9c, m2) slab is built with aligned 8-row scratch stores.
    def conv3x3(inp, wref, bref, relu):
        for kk, o in enumerate(offs2):
            slab2_ref[kk * c:(kk + 1) * c, :] = (
                _shift_cols(inp, o) * m2_ref[kk * c:(kk + 1) * c, :])
        out = jnp.dot(wref[...], slab2_ref[...].astype(bf16),
                      preferred_element_type=f32) + bref[...]
        return jnp.maximum(out, 0.0) if relu else out

    y = conv3x3(a0, w2a_ref, b2a_ref, relu=True)
    y = conv3x3(y, w2b_ref, b2b_ref, relu=False)
    layer1 = jnp.maximum(y + a0, 0.0)                    # (c, m2)

    # ---- lane-dense feature output: single unmasked (c, n*ho*wo) store --------
    feat_ref[...] = layer1

    # ---- adaptive avg pool (hoisted one-hot-average matmul) + fc --------------
    pooled = lax.dot_general(avg_ref[...], layer1, (((1,), (1,)), ((), ())),
                             preferred_element_type=f32)            # (n, c)
    pool_ref[...] = pooled
    logits_ref[...] = (jnp.dot(pooled, fcw_ref[...], preferred_element_type=f32)
                       + fcb_ref[...])


# ---------------------------------------------------------------------------
# Host wrapper (BN folding + constant hoisting + single pallas_call)
# ---------------------------------------------------------------------------
def _bn_fold(gamma, beta, mean, var, eps=1e-5):
    scale = gamma / jnp.sqrt(var + eps)
    shift = beta - mean * scale
    return scale, shift


def _build_constants(n, h, w, c):
    """Compile-time-constant tap masks / pooling matrices (plain numpy)."""
    ho, wo = h // 2, w // 2
    m1, m2 = n * h * w, n * ho * wo

    def tap_masks(hh_, ww_, hd, wd):
        out = []
        for di in (-1, 0, 1):
            for dj in (-1, 0, 1):
                ok = ((hh_ + di >= 0) & (hh_ + di < hd)
                      & (ww_ + dj >= 0) & (ww_ + dj < wd))
                out.append(ok.astype(np.float32))
        return np.stack(out, axis=0)

    s1 = np.arange(m1)
    masks1 = tap_masks((s1 // w) % h, s1 % w, h, w)                   # (9, m1)
    s2 = np.arange(m2)
    masks2 = np.repeat(tap_masks((s2 // wo) % ho, s2 % wo, ho, wo),
                       c, axis=0)                                     # (9c, m2)

    cols = np.arange(m2)
    img, rem = cols // (ho * wo), cols % (ho * wo)
    src = img * (h * w) + (rem // wo) * (2 * w) + (rem % wo) * 2
    sel = np.zeros((m1, m2), np.float32)
    sel[src, cols] = 1.0                                              # maxpool one-hot

    avg = np.zeros((n, m2), np.float32)
    avg[img, cols] = 1.0 / (ho * wo)                                  # avgpool average
    return masks1, masks2, sel, avg


@jax.jit
def modified_resnet_forward(x_nchw, p):
    N, Cin, H, W = x_nchw.shape
    assert Cin == 1 and H % 2 == 0 and W % 2 == 0
    C = p["conv1_w"].shape[0]
    Ho, Wo = H // 2, W // 2
    M1, M2 = N * H * W, N * Ho * Wo

    # Fold eval-mode BN into conv weights / bias (tiny host-side tensors).
    s1, b1 = _bn_fold(p["bn1_gamma"], p["bn1_beta"], p["bn1_mean"], p["bn1_var"])
    sa, ba = _bn_fold(p["bn2a_gamma"], p["bn2a_beta"], p["bn2a_mean"], p["bn2a_var"])
    sb, bb = _bn_fold(p["bn2b_gamma"], p["bn2b_beta"], p["bn2b_mean"], p["bn2b_var"])

    # MXU operands in bf16 (accumulation stays f32 inside the kernel).
    w1 = (p["conv1_w"] * s1[:, None, None, None]).reshape(C, 9).astype(jnp.bfloat16)
    w2a = ((p["conv2a_w"] * sa[:, None, None, None]).transpose(0, 2, 3, 1)
           .reshape(C, 9 * C).astype(jnp.bfloat16))
    w2b = ((p["conv2b_w"] * sb[:, None, None, None]).transpose(0, 2, 3, 1)
           .reshape(C, 9 * C).astype(jnp.bfloat16))

    masks1, masks2, sel, avg = _build_constants(N, H, W, C)
    sel_bf16 = jnp.asarray(sel).astype(jnp.bfloat16)

    x_cm = x_nchw.reshape(1, M1)                 # Cin=1: channels-major row

    kern = functools.partial(_resnet_kernel, n=N, h=H, w=W, c=C)
    flops = (2 * C * 9 * M1                      # conv1
             + 2 * C * M1 * M2                   # maxpool selection matmul
             + 2 * (2 * C * (9 * C) * M2)        # block convs
             + 2 * N * M2 * C + 2 * N * C * 10)  # avgpool + fc
    bytes_acc = (4 * (M1 + 9 * M1 + 9 * C * M2 + N * M2 + 3 * C + C * 10 + 10
                      + N * 10 + C * M2 + N * C)
                 + 2 * (M1 * M2 + C * 9 + 2 * C * 9 * C))

    # TODO(synk): for realistic batch sizes, add a batch grid axis with
    # BlockSpec index_maps + dimension_semantics=("parallel",) so the work is
    # pipelined and sharded across v7x's two TensorCores; the N=2 toy problem
    # fits trivially in VMEM, so a single un-gridded call is used here.
    logits, feat_cm, pooled = pl.pallas_call(
        kern,
        out_shape=(jax.ShapeDtypeStruct((N, 10), jnp.float32),
                   jax.ShapeDtypeStruct((C, M2), jnp.float32),
                   jax.ShapeDtypeStruct((N, C), jnp.float32)),
        in_specs=[pl.BlockSpec(memory_space=pltpu.MemorySpace.VMEM)] * 13,
        out_specs=(pl.BlockSpec(memory_space=pltpu.MemorySpace.VMEM),) * 3,
        scratch_shapes=[pltpu.VMEM((9, M1), jnp.float32),
                        pltpu.VMEM((9 * C, M2), jnp.float32)],
        compiler_params=pltpu.CompilerParams(vmem_limit_bytes=32 * 1024 * 1024),
        cost_estimate=pl.CostEstimate(flops=flops, transcendentals=0,
                                      bytes_accessed=bytes_acc),
    )(x_cm, jnp.asarray(masks1), jnp.asarray(masks2), sel_bf16, jnp.asarray(avg),
      w1, b1.reshape(C, 1), w2a, ba.reshape(C, 1), w2b, bb.reshape(C, 1),
      p["fc_w"].T, p["fc_b"].reshape(1, 10))

    # feat_cm is (C, N*Ho*Wo) channels-major; rearrange host-side into the
    # PyTorch flatten(start_dim=1)-of-NCHW order.
    feat = feat_cm.reshape(C, N, Ho * Wo).transpose(1, 0, 2).reshape(N, C * Ho * Wo)
    return logits, [feat, pooled]


# ---------------------------------------------------------------------------
# Parameters (deterministic, synthetic)
# ---------------------------------------------------------------------------
def make_params(key):
    ks = jax.random.split(key, 20)

    def nrm(k, shape, s=0.1):
        return s * jax.random.normal(k, shape, dtype=jnp.float32)

    return {
        "conv1_w": nrm(ks[0], (8, 1, 3, 3)),
        "bn1_gamma": 1.0 + nrm(ks[1], (8,)),
        "bn1_beta": nrm(ks[2], (8,)),
        "bn1_mean": nrm(ks[3], (8,)),
        "bn1_var": jnp.abs(1.0 + nrm(ks[4], (8,))),
        "conv2a_w": nrm(ks[5], (8, 8, 3, 3)),
        "bn2a_gamma": 1.0 + nrm(ks[6], (8,)),
        "bn2a_beta": nrm(ks[7], (8,)),
        "bn2a_mean": nrm(ks[8], (8,)),
        "bn2a_var": jnp.abs(1.0 + nrm(ks[9], (8,))),
        "conv2b_w": nrm(ks[10], (8, 8, 3, 3)),
        "bn2b_gamma": 1.0 + nrm(ks[11], (8,)),
        "bn2b_beta": nrm(ks[12], (8,)),
        "bn2b_mean": nrm(ks[13], (8,)),
        "bn2b_var": jnp.abs(1.0 + nrm(ks[14], (8,))),
        "fc_w": nrm(ks[15], (10, 8)),   # PyTorch Linear(8, 10).weight layout (out, in)
        "fc_b": nrm(ks[16], (10,)),
    }


# ---------------------------------------------------------------------------
# Pure-JAX reference (for correctness check of the fused kernel)
# ---------------------------------------------------------------------------
def _reference_forward(x, p):
    def conv(xx, w):
        return lax.conv_general_dilated(xx, w, (1, 1), ((1, 1), (1, 1)),
                                        dimension_numbers=("NCHW", "OIHW", "NCHW"))

    def bn(xx, g, b, m, v, eps=1e-5):
        s = g / jnp.sqrt(v + eps)
        return xx * s[None, :, None, None] + (b - m * s)[None, :, None, None]

    y = jax.nn.relu(bn(conv(x, p["conv1_w"]), p["bn1_gamma"], p["bn1_beta"],
                       p["bn1_mean"], p["bn1_var"]))
    y = lax.reduce_window(y, -jnp.inf, lax.max, (1, 1, 2, 2), (1, 1, 2, 2), "VALID")
    ident = y
    z = jax.nn.relu(bn(conv(y, p["conv2a_w"]), p["bn2a_gamma"], p["bn2a_beta"],
                       p["bn2a_mean"], p["bn2a_var"]))
    z = bn(conv(z, p["conv2b_w"]), p["bn2b_gamma"], p["bn2b_beta"],
           p["bn2b_mean"], p["bn2b_var"])
    layer1 = jax.nn.relu(z + ident)
    out0 = layer1.reshape(layer1.shape[0], -1)
    pooled = layer1.mean(axis=(2, 3))
    logits = pooled @ p["fc_w"].T + p["fc_b"]
    return logits, [out0, pooled]


# ---------------------------------------------------------------------------
if __name__ == "__main__":
    key = jax.random.PRNGKey(0)
    k_in, k_par = jax.random.split(key)

    x = jax.random.normal(k_in, (2, 1, 16, 16), dtype=jnp.float32)  # NCHW, MNIST-like
    params = make_params(k_par)

    logits, outs = modified_resnet_forward(x, params)
    logits = jax.block_until_ready(logits)
    outs = [jax.block_until_ready(o) for o in outs]

    assert logits.shape == (2, 10)
    assert outs[0].shape == (2, 8 * 8 * 8)
    assert outs[1].shape == (2, 8)
    assert all(bool(jnp.all(jnp.isfinite(o))) for o in [logits] + outs)

    ref_logits, ref_outs = _reference_forward(x, params)
    assert jnp.allclose(logits, ref_logits, atol=2e-2, rtol=2e-2)
    assert jnp.allclose(outs[0], ref_outs[0], atol=2e-2, rtol=2e-2)
    assert jnp.allclose(outs[1], ref_outs[1], atol=2e-2, rtol=2e-2)

    print("KERNEL_OK")
</pallas_src>

<mosaic_0001>
module attributes {stable_mosaic.version = 11 : i64} {
  func.func @_resnet_kernel(%arg0: memref<1x512xf32, #tpu.memory_space<vmem>>, %arg1: memref<9x512xf32, #tpu.memory_space<vmem>>, %arg2: memref<72x128xf32, #tpu.memory_space<vmem>>, %arg3: memref<512x128xbf16, #tpu.memory_space<vmem>>, %arg4: memref<2x128xf32, #tpu.memory_space<vmem>>, %arg5: memref<8x9xbf16, #tpu.memory_space<vmem>>, %arg6: memref<8x1xf32, #tpu.memory_space<vmem>>, %arg7: memref<8x72xbf16, #tpu.memory_space<vmem>>, %arg8: memref<8x1xf32, #tpu.memory_space<vmem>>, %arg9: memref<8x72xbf16, #tpu.memory_space<vmem>>, %arg10: memref<8x1xf32, #tpu.memory_space<vmem>>, %arg11: memref<8x10xf32, #tpu.memory_space<vmem>>, %arg12: memref<1x10xf32, #tpu.memory_space<vmem>>, %arg13: memref<2x10xf32, #tpu.memory_space<vmem>>, %arg14: memref<8x128xf32, #tpu.memory_space<vmem>>, %arg15: memref<2x8xf32, #tpu.memory_space<vmem>>, %arg16: memref<9x512xf32, #tpu.memory_space<vmem>>, %arg17: memref<72x128xf32, #tpu.memory_space<vmem>>) attributes {dimension_semantics = [], scalar_prefetch = 0 : i64, scratch_operands = 2 : i64, tpu.core_type = #tpu.core_type<tc>} {
    %c0 = arith.constant 0 : index
    %c0_0 = arith.constant 0 : index
    %0 = vector.load %arg0[%c0, %c0_0] : memref<1x512xf32, #tpu.memory_space<vmem>>, vector<1x512xf32>
    %cst = arith.constant 0.000000e+00 : f32
    %1 = vector.broadcast %cst : f32 to vector<1x17xf32>
    %2 = vector.extract_strided_slice %0 {offsets = [0, 0], sizes = [1, 495], strides = [1, 1]} : vector<1x512xf32> to vector<1x495xf32>
    %3 = tpu.concatenate %1, %2 in 1 : vector<1x17xf32>, vector<1x495xf32> -> vector<1x512xf32>
    %c0_1 = arith.constant 0 : index
    %c0_2 = arith.constant 0 : index
    %4 = vector.load %arg1[%c0_1, %c0_2] : memref<9x512xf32, #tpu.memory_space<vmem>>, vector<1x512xf32>
    %5 = arith.mulf %3, %4 : vector<1x512xf32>
    %c0_3 = arith.constant 0 : index
    %c0_4 = arith.constant 0 : index
    %6 = vector.load %arg16[%c0_3, %c0_4] : memref<9x512xf32, #tpu.memory_space<vmem>>, vector<1x512xf32>
    tpu.vector_store %arg16[%c0_3, %c0_4], %5 {strides = array<i32>} : memref<9x512xf32, #tpu.memory_space<vmem>>, vector<1x512xf32>,
    %cst_5 = arith.constant 0.000000e+00 : f32
    %7 = vector.broadcast %cst_5 : f32 to vector<1x16xf32>
    %8 = vector.extract_strided_slice %0 {offsets = [0, 0], sizes = [1, 496], strides = [1, 1]} : vector<1x512xf32> to vector<1x496xf32>
    %9 = tpu.concatenate %7, %8 in 1 : vector<1x16xf32>, vector<1x496xf32> -> vector<1x512xf32>
    %c1 = arith.constant 1 : index
    %c0_6 = arith.constant 0 : index
    %10 = vector.load %arg1[%c1, %c0_6] : memref<9x512xf32, #tpu.memory_space<vmem>>, vector<1x512xf32>
    %11 = arith.mulf %9, %10 : vector<1x512xf32>
    %c1_7 = arith.constant 1 : index
    %c0_8 = arith.constant 0 : index
    %12 = vector.load %arg16[%c1_7, %c0_8] : memref<9x512xf32, #tpu.memory_space<vmem>>, vector<1x512xf32>
    tpu.vector_store %arg16[%c1_7, %c0_8], %11 {strides = array<i32>} : memref<9x512xf32, #tpu.memory_space<vmem>>, vector<1x512xf32>,
    %cst_9 = arith.constant 0.000000e+00 : f32
    %13 = vector.broadcast %cst_9 : f32 to vector<1x15xf32>
    %14 = vector.extract_strided_slice %0 {offsets = [0, 0], sizes = [1, 497], strides = [1, 1]} : vector<1x512xf32> to vector<1x497xf32>
    %15 = tpu.concatenate %13, %14 in 1 : vector<1x15xf32>, vector<1x497xf32> -> vector<1x512xf32>
    %c2 = arith.constant 2 : index
    %c0_10 = arith.constant 0 : index
    %16 = vector.load %arg1[%c2, %c0_10] : memref<9x512xf32, #tpu.memory_space<vmem>>, vector<1x512xf32>
    %17 = arith.mulf %15, %16 : vector<1x512xf32>
    %c2_11 = arith.constant 2 : index
    %c0_12 = arith.constant 0 : index
    %18 = vector.load %arg16[%c2_11, %c0_12] : memref<9x512xf32, #tpu.memory_space<vmem>>, vector<1x512xf32>
    tpu.vector_store %arg16[%c2_11, %c0_12], %17 {strides = array<i32>} : memref<9x512xf32, #tpu.memory_space<vmem>>, vector<1x512xf32>,
    %cst_13 = arith.constant 0.000000e+00 : f32
    %19 = vector.broadcast %cst_13 : f32 to vector<1x1xf32>
    %20 = vector.extract_strided_slice %0 {offsets = [0, 0], sizes = [1, 511], strides = [1, 1]} : vector<1x512xf32> to vector<1x511xf32>
    %21 = tpu.concatenate %19, %20 in 1 : vector<1x1xf32>, vector<1x511xf32> -> vector<1x512xf32>
    %c3 = arith.constant 3 : index
    %c0_14 = arith.constant 0 : index
    %22 = vector.load %arg1[%c3, %c0_14] : memref<9x512xf32, #tpu.memory_space<vmem>>, vector<1x512xf32>
    %23 = arith.mulf %21, %22 : vector<1x512xf32>
    %c3_15 = arith.constant 3 : index
    %c0_16 = arith.constant 0 : index
    %24 = vector.load %arg16[%c3_15, %c0_16] : memref<9x512xf32, #tpu.memory_space<vmem>>, vector<1x512xf32>
    tpu.vector_store %arg16[%c3_15, %c0_16], %23 {strides = array<i32>} : memref<9x512xf32, #tpu.memory_space<vmem>>, vector<1x512xf32>,
    %c4 = arith.constant 4 : index
    %c0_17 = arith.constant 0 : index
    %25 = vector.load %arg1[%c4, %c0_17] : memref<9x512xf32, #tpu.memory_space<vmem>>, vector<1x512xf32>
    %26 = arith.mulf %0, %25 : vector<1x512xf32>
    %c4_18 = arith.constant 4 : index
    %c0_19 = arith.constant 0 : index
    %27 = vector.load %arg16[%c4_18, %c0_19] : memref<9x512xf32, #tpu.memory_space<vmem>>, vector<1x512xf32>
    tpu.vector_store %arg16[%c4_18, %c0_19], %26 {strides = array<i32>} : memref<9x512xf32, #tpu.memory_space<vmem>>, vector<1x512xf32>,
    %28 = vector.extract_strided_slice %0 {offsets = [0, 1], sizes = [1, 511], strides = [1, 1]} : vector<1x512xf32> to vector<1x511xf32>
    %cst_20 = arith.constant 0.000000e+00 : f32
    %29 = vector.broadcast %cst_20 : f32 to vector<1x1xf32>
    %30 = tpu.concatenate %28, %29 in 1 : vector<1x511xf32>, vector<1x1xf32> -> vector<1x512xf32>
    %c5 = arith.constant 5 : index
    %c0_21 = arith.constant 0 : index
    %31 = vector.load %arg1[%c5, %c0_21] : memref<9x512xf32, #tpu.memory_space<vmem>>, vector<1x512xf32>
    %32 = arith.mulf %30, %31 : vector<1x512xf32>
    %c5_22 = arith.constant 5 : index
    %c0_23 = arith.constant 0 : index
    %33 = vector.load %arg16[%c5_22, %c0_23] : memref<9x512xf32, #tpu.memory_space<vmem>>, vector<1x512xf32>
    tpu.vector_store %arg16[%c5_22, %c0_23], %32 {strides = array<i32>} : memref<9x512xf32, #tpu.memory_space<vmem>>, vector<1x512xf32>,
    %34 = vector.extract_strided_slice %0 {offsets = [0, 15], sizes = [1, 497], strides = [1, 1]} : vector<1x512xf32> to vector<1x497xf32>
    %cst_24 = arith.constant 0.000000e+00 : f32
    %35 = vector.broadcast %cst_24 : f32 to vector<1x15xf32>
    %36 = tpu.concatenate %34, %35 in 1 : vector<1x497xf32>, vector<1x15xf32> -> vector<1x512xf32>
    %c6 = arith.constant 6 : index
    %c0_25 = arith.constant 0 : index
    %37 = vector.load %arg1[%c6, %c0_25] : memref<9x512xf32, #tpu.memory_space<vmem>>, vector<1x512xf32>
    %38 = arith.mulf %36, %37 : vector<1x512xf32>
    %c6_26 = arith.constant 6 : index
    %c0_27 = arith.constant 0 : index
    %39 = vector.load %arg16[%c6_26, %c0_27] : memref<9x512xf32, #tpu.memory_space<vmem>>, vector<1x512xf32>
    tpu.vector_store %arg16[%c6_26, %c0_27], %38 {strides = array<i32>} : memref<9x512xf32, #tpu.memory_space<vmem>>, vector<1x512xf32>,
    %40 = vector.extract_strided_slice %0 {offsets = [0, 16], sizes = [1, 496], strides = [1, 1]} : vector<1x512xf32> to vector<1x496xf32>
    %cst_28 = arith.constant 0.000000e+00 : f32
    %41 = vector.broadcast %cst_28 : f32 to vector<1x16xf32>
    %42 = tpu.concatenate %40, %41 in 1 : vector<1x496xf32>, vector<1x16xf32> -> vector<1x512xf32>
    %c7 = arith.constant 7 : index
    %c0_29 = arith.constant 0 : index
    %43 = vector.load %arg1[%c7, %c0_29] : memref<9x512xf32, #tpu.memory_space<vmem>>, vector<1x512xf32>
    %44 = arith.mulf %42, %43 : vector<1x512xf32>
    %c7_30 = arith.constant 7 : index
    %c0_31 = arith.constant 0 : index
    %45 = vector.load %arg16[%c7_30, %c0_31] : memref<9x512xf32, #tpu.memory_space<vmem>>, vector<1x512xf32>
    tpu.vector_store %arg16[%c7_30, %c0_31], %44 {strides = array<i32>} : memref<9x512xf32, #tpu.memory_space<vmem>>, vector<1x512xf32>,
    %46 = vector.extract_strided_slice %0 {offsets = [0, 17], sizes = [1, 495], strides = [1, 1]} : vector<1x512xf32> to vector<1x495xf32>
    %cst_32 = arith.constant 0.000000e+00 : f32
    %47 = vector.broadcast %cst_32 : f32 to vector<1x17xf32>
    %48 = tpu.concatenate %46, %47 in 1 : vector<1x495xf32>, vector<1x17xf32> -> vector<1x512xf32>
    %c8 = arith.constant 8 : index
    %c0_33 = arith.constant 0 : index
    %49 = vector.load %arg1[%c8, %c0_33] : memref<9x512xf32, #tpu.memory_space<vmem>>, vector<1x512xf32>
    %50 = arith.mulf %48, %49 : vector<1x512xf32>
    %c8_34 = arith.constant 8 : index
    %c0_35 = arith.constant 0 : index
    %51 = vector.load %arg16[%c8_34, %c0_35] : memref<9x512xf32, #tpu.memory_space<vmem>>, vector<1x512xf32>
    tpu.vector_store %arg16[%c8_34, %c0_35], %50 {strides = array<i32>} : memref<9x512xf32, #tpu.memory_space<vmem>>, vector<1x512xf32>,
    %c0_36 = arith.constant 0 : index
    %c0_37 = arith.constant 0 : index
    %52 = vector.load %arg5[%c0_36, %c0_37] : memref<8x9xbf16, #tpu.memory_space<vmem>>, vector<8x9xbf16>
    %c0_38 = arith.constant 0 : index
    %c0_39 = arith.constant 0 : index
    %53 = vector.load %arg16[%c0_38, %c0_39] : memref<9x512xf32, #tpu.memory_space<vmem>>, vector<9x512xf32>
    %54 = arith.truncf %53 : vector<9x512xf32> to vector<9x512xbf16>
    %cst_40 = arith.constant dense<0.000000e+00> : vector<8x512xf32>
    %55 = tpu.matmul %52, %54, %cst_40 {dimension_numbers = #tpu.dot_dimension_numbers<[1], [0], [0], [1], [0, 0, 1, 1], [], []>} : vector<8x9xbf16>, vector<9x512xbf16>, vector<8x512xf32> -> vector<8x512xf32>
    %c0_41 = arith.constant 0 : index
    %c0_42 = arith.constant 0 : index
    %56 = vector.load %arg6[%c0_41, %c0_42] : memref<8x1xf32, #tpu.memory_space<vmem>>, vector<8x1xf32>
    %57 = vector.broadcast %56 : vector<8x1xf32> to vector<8x512xf32>
    %58 = arith.addf %55, %57 : vector<8x512xf32>
    %cst_43 = arith.constant 0.000000e+00 : f32
    %59 = vector.broadcast %cst_43 : f32 to vector<8x512xf32>
    %60 = arith.maximumf %58, %59 : vector<8x512xf32>
    %61 = vector.extract_strided_slice %60 {offsets = [0, 1], sizes = [8, 511], strides = [1, 1]} : vector<8x512xf32> to vector<8x511xf32>
    %cst_44 = arith.constant 0.000000e+00 : f32
    %62 = vector.broadcast %cst_44 : f32 to vector<8x1xf32>
    %63 = tpu.concatenate %61, %62 in 1 : vector<8x511xf32>, vector<8x1xf32> -> vector<8x512xf32>
    %64 = arith.maximumf %60, %63 : vector<8x512xf32>
    %65 = vector.extract_strided_slice %60 {offsets = [0, 16], sizes = [8, 496], strides = [1, 1]} : vector<8x512xf32> to vector<8x496xf32>
    %cst_45 = arith.constant 0.000000e+00 : f32
    %66 = vector.broadcast %cst_45 : f32 to vector<8x16xf32>
    %67 = tpu.concatenate %65, %66 in 1 : vector<8x496xf32>, vector<8x16xf32> -> vector<8x512xf32>
    %68 = vector.extract_strided_slice %60 {offsets = [0, 17], sizes = [8, 495], strides = [1, 1]} : vector<8x512xf32> to vector<8x495xf32>
    %cst_46 = arith.constant 0.000000e+00 : f32
    %69 = vector.broadcast %cst_46 : f32 to vector<8x17xf32>
    %70 = tpu.concatenate %68, %69 in 1 : vector<8x495xf32>, vector<8x17xf32> -> vector<8x512xf32>
    %71 = arith.maximumf %67, %70 : vector<8x512xf32>
    %72 = arith.maximumf %64, %71 : vector<8x512xf32>
    %73 = arith.truncf %72 : vector<8x512xf32> to vector<8x512xbf16>
    %c0_47 = arith.constant 0 : index
    %c0_48 = arith.constant 0 : index
    %74 = vector.load %arg3[%c0_47, %c0_48] : memref<512x128xbf16, #tpu.memory_space<vmem>>, vector<512x128xbf16>
    %cst_49 = arith.constant dense<0.000000e+00> : vector<8x128xf32>
    %75 = tpu.matmul %73, %74, %cst_49 {dimension_numbers = #tpu.dot_dimension_numbers<[1], [0], [0], [1], [0, 0, 1, 1], [], []>} : vector<8x512xbf16>, vector<512x128xbf16>, vector<8x128xf32> -> vector<8x128xf32>
    %cst_50 = arith.constant 0.000000e+00 : f32
    %76 = vector.broadcast %cst_50 : f32 to vector<8x9xf32>
    %77 = vector.extract_strided_slice %75 {offsets = [0, 0], sizes = [8, 119], strides = [1, 1]} : vector<8x128xf32> to vector<8x119xf32>
    %78 = tpu.concatenate %76, %77 in 1 : vector<8x9xf32>, vector<8x119xf32> -> vector<8x128xf32>
    %c0_51 = arith.constant 0 : index
    %c0_52 = arith.constant 0 : index
    %79 = vector.load %arg2[%c0_51, %c0_52] : memref<72x128xf32, #tpu.memory_space<vmem>>, vector<8x128xf32>
    %80 = arith.mulf %78, %79 : vector<8x128xf32>
    %c0_53 = arith.constant 0 : index
    %c0_54 = arith.constant 0 : index
    %81 = vector.load %arg17[%c0_53, %c0_54] : memref<72x128xf32, #tpu.memory_space<vmem>>, vector<8x128xf32>
    tpu.vector_store %arg17[%c0_53, %c0_54], %80 {strides = array<i32>} : memref<72x128xf32, #tpu.memory_space<vmem>>, vector<8x128xf32>,
    %cst_55 = arith.constant 0.000000e+00 : f32
    %82 = vector.broadcast %cst_55 : f32 to vector<8x8xf32>
    %83 = vector.extract_strided_slice %75 {offsets = [0, 0], sizes = [8, 120], strides = [1, 1]} : vector<8x128xf32> to vector<8x120xf32>
    %84 = tpu.concatenate %82, %83 in 1 : vector<8x8xf32>, vector<8x120xf32> -> vector<8x128xf32>
    %c8_56 = arith.constant 8 : index
    %c0_57 = arith.constant 0 : index
    %85 = vector.load %arg2[%c8_56, %c0_57] : memref<72x128xf32, #tpu.memory_space<vmem>>, vector<8x128xf32>
    %86 = arith.mulf %84, %85 : vector<8x128xf32>
    %c8_58 = arith.constant 8 : index
    %c0_59 = arith.constant 0 : index
    %87 = vector.load %arg17[%c8_58, %c0_59] : memref<72x128xf32, #tpu.memory_space<vmem>>, vector<8x128xf32>
    tpu.vector_store %arg17[%c8_58, %c0_59], %86 {strides = array<i32>} : memref<72x128xf32, #tpu.memory_space<vmem>>, vector<8x128xf32>,
    %cst_60 = arith.constant 0.000000e+00 : f32
    %88 = vector.broadcast %cst_60 : f32 to vector<8x7xf32>
    %89 = vector.extract_strided_slice %75 {offsets = [0, 0], sizes = [8, 121], strides = [1, 1]} : vector<8x128xf32> to vector<8x121xf32>
    %90 = tpu.concatenate %88, %89 in 1 : vector<8x7xf32>, vector<8x121xf32> -> vector<8x128xf32>
    %c16 = arith.constant 16 : index
    %c0_61 = arith.constant 0 : index
    %91 = vector.load %arg2[%c16, %c0_61] : memref<72x128xf32, #tpu.memory_space<vmem>>, vector<8x128xf32>
    %92 = arith.mulf %90, %91 : vector<8x128xf32>
    %c16_62 = arith.constant 16 : index
    %c0_63 = arith.constant 0 : index
    %93 = vector.load %arg17[%c16_62, %c0_63] : memref<72x128xf32, #tpu.memory_space<vmem>>, vector<8x128xf32>
    tpu.vector_store %arg17[%c16_62, %c0_63], %92 {strides = array<i32>} : memref<72x128xf32, #tpu.memory_space<vmem>>, vector<8x128xf32>,
    %cst_64 = arith.constant 0.000000e+00 : f32
    %94 = vector.broadcast %cst_64 : f32 to vector<8x1xf32>
    %95 = vector.extract_strided_slice %75 {offsets = [0, 0], sizes = [8, 127], strides = [1, 1]} : vector<8x128xf32> to vector<8x127xf32>
    %96 = tpu.concatenate %94, %95 in 1 : vector<8x1xf32>, vector<8x127xf32> -> vector<8x128xf32>
    %c24 = arith.constant 24 : index
    %c0_65 = arith.constant 0 : index
    %97 = vector.load %arg2[%c24, %c0_65] : memref<72x128xf32, #tpu.memory_space<vmem>>, vector<8x128xf32>
    %98 = arith.mulf %96, %97 : vector<8x128xf32>
    %c24_66 = arith.constant 24 : index
    %c0_67 = arith.constant 0 : index
    %99 = vector.load %arg17[%c24_66, %c0_67] : memref<72x128xf32, #tpu.memory_space<vmem>>, vector<8x128xf32>
    tpu.vector_store %arg17[%c24_66, %c0_67], %98 {strides = array<i32>} : memref<72x128xf32, #tpu.memory_space<vmem>>, vector<8x128xf32>,
    %c32 = arith.constant 32 : index
    %c0_68 = arith.constant 0 : index
    %100 = vector.load %arg2[%c32, %c0_68] : memref<72x128xf32, #tpu.memory_space<vmem>>, vector<8x128xf32>
    %101 = arith.mulf %75, %100 : vector<8x128xf32>
    %c32_69 = arith.constant 32 : index
    %c0_70 = arith.constant 0 : index
    %102 = vector.load %arg17[%c32_69, %c0_70] : memref<72x128xf32, #tpu.memory_space<vmem>>, vector<8x128xf32>
    tpu.vector_store %arg17[%c32_69, %c0_70], %101 {strides = array<i32>} : memref<72x128xf32, #tpu.memory_space<vmem>>, vector<8x128xf32>,
    %103 = vector.extract_strided_slice %75 {offsets = [0, 1], sizes = [8, 127], strides = [1, 1]} : vector<8x128xf32> to vector<8x127xf32>
    %cst_71 = arith.constant 0.000000e+00 : f32
    %104 = vector.broadcast %cst_71 : f32 to vector<8x1xf32>
    %105 = tpu.concatenate %103, %104 in 1 : vector<8x127xf32>, vector<8x1xf32> -> vector<8x128xf32>
    %c40 = arith.constant 40 : index
    %c0_72 = arith.constant 0 : index
    %106 = vector.load %arg2[%c40, %c0_72] : memref<72x128xf32, #tpu.memory_space<vmem>>, vector<8x128xf32>
    %107 = arith.mulf %105, %106 : vector<8x128xf32>
    %c40_73 = arith.constant 40 : index
    %c0_74 = arith.constant 0 : index
    %108 = vector.load %arg17[%c40_73, %c0_74] : memref<72x128xf32, #tpu.memory_space<vmem>>, vector<8x128xf32>
    tpu.vector_store %arg17[%c40_73, %c0_74], %107 {strides = array<i32>} : memref<72x128xf32, #tpu.memory_space<vmem>>, vector<8x128xf32>,
    %109 = vector.extract_strided_slice %75 {offsets = [0, 7], sizes = [8, 121], strides = [1, 1]} : vector<8x128xf32> to vector<8x121xf32>
    %cst_75 = arith.constant 0.000000e+00 : f32
    %110 = vector.broadcast %cst_75 : f32 to vector<8x7xf32>
    %111 = tpu.concatenate %109, %110 in 1 : vector<8x121xf32>, vector<8x7xf32> -> vector<8x128xf32>
    %c48 = arith.constant 48 : index
    %c0_76 = arith.constant 0 : index
    %112 = vector.load %arg2[%c48, %c0_76] : memref<72x128xf32, #tpu.memory_space<vmem>>, vector<8x128xf32>
    %113 = arith.mulf %111, %112 : vector<8x128xf32>
    %c48_77 = arith.constant 48 : index
    %c0_78 = arith.constant 0 : index
    %114 = vector.load %arg17[%c48_77, %c0_78] : memref<72x128xf32, #tpu.memory_space<vmem>>, vector<8x128xf32>
    tpu.vector_store %arg17[%c48_77, %c0_78], %113 {strides = array<i32>} : memref<72x128xf32, #tpu.memory_space<vmem>>, vector<8x128xf32>,
    %115 = vector.extract_strided_slice %75 {offsets = [0, 8], sizes = [8, 120], strides = [1, 1]} : vector<8x128xf32> to vector<8x120xf32>
    %cst_79 = arith.constant 0.000000e+00 : f32
    %116 = vector.broadcast %cst_79 : f32 to vector<8x8xf32>
    %117 = tpu.concatenate %115, %116 in 1 : vector<8x120xf32>, vector<8x8xf32> -> vector<8x128xf32>
    %c56 = arith.constant 56 : index
    %c0_80 = arith.constant 0 : index
    %118 = vector.load %arg2[%c56, %c0_80] : memref<72x128xf32, #tpu.memory_space<vmem>>, vector<8x128xf32>
    %119 = arith.mulf %117, %118 : vector<8x128xf32>
    %c56_81 = arith.constant 56 : index
    %c0_82 = arith.constant 0 : index
    %120 = vector.load %arg17[%c56_81, %c0_82] : memref<72x128xf32, #tpu.memory_space<vmem>>, vector<8x128xf32>
    tpu.vector_store %arg17[%c56_81, %c0_82], %119 {strides = array<i32>} : memref<72x128xf32, #tpu.memory_space<vmem>>, vector<8x128xf32>,
    %121 = vector.extract_strided_slice %75 {offsets = [0, 9], sizes = [8, 119], strides = [1, 1]} : vector<8x128xf32> to vector<8x119xf32>
    %cst_83 = arith.constant 0.000000e+00 : f32
    %122 = vector.broadcast %cst_83 : f32 to vector<8x9xf32>
    %123 = tpu.concatenate %121, %122 in 1 : vector<8x119xf32>, vector<8x9xf32> -> vector<8x128xf32>
    %c64 = arith.constant 64 : index
    %c0_84 = arith.constant 0 : index
    %124 = vector.load %arg2[%c64, %c0_84] : memref<72x128xf32, #tpu.memory_space<vmem>>, vector<8x128xf32>
    %125 = arith.mulf %123, %124 : vector<8x128xf32>
    %c64_85 = arith.constant 64 : index
    %c0_86 = arith.constant 0 : index
    %126 = vector.load %arg17[%c64_85, %c0_86] : memref<72x128xf32, #tpu.memory_space<vmem>>, vector<8x128xf32>
    tpu.vector_store %arg17[%c64_85, %c0_86], %125 {strides = array<i32>} : memref<72x128xf32, #tpu.memory_space<vmem>>, vector<8x128xf32>,
    %c0_87 = arith.constant 0 : index
    %c0_88 = arith.constant 0 : index
    %127 = vector.load %arg7[%c0_87, %c0_88] : memref<8x72xbf16, #tpu.memory_space<vmem>>, vector<8x72xbf16>
    %c0_89 = arith.constant 0 : index
    %c0_90 = arith.constant 0 : index
    %128 = vector.load %arg17[%c0_89, %c0_90] : memref<72x128xf32, #tpu.memory_space<vmem>>, vector<72x128xf32>
    %129 = arith.truncf %128 : vector<72x128xf32> to vector<72x128xbf16>
    %cst_91 = arith.constant dense<0.000000e+00> : vector<8x128xf32>
    %130 = tpu.matmul %127, %129, %cst_91 {dimension_numbers = #tpu.dot_dimension_numbers<[1], [0], [0], [1], [0, 0, 1, 1], [], []>} : vector<8x72xbf16>, vector<72x128xbf16>, vector<8x128xf32> -> vector<8x128xf32>
    %c0_92 = arith.constant 0 : index
    %c0_93 = arith.constant 0 : index
    %131 = vector.load %arg8[%c0_92, %c0_93] : memref<8x1xf32, #tpu.memory_space<vmem>>, vector<8x1xf32>
    %132 = vector.broadcast %131 : vector<8x1xf32> to vector<8x128xf32>
    %133 = arith.addf %130, %132 : vector<8x128xf32>
    %cst_94 = arith.constant 0.000000e+00 : f32
    %134 = vector.broadcast %cst_94 : f32 to vector<8x128xf32>
    %135 = arith.maximumf %133, %134 : vector<8x128xf32>
    %cst_95 = arith.constant 0.000000e+00 : f32
    %136 = vector.broadcast %cst_95 : f32 to vector<8x9xf32>
    %137 = vector.extract_strided_slice %135 {offsets = [0, 0], sizes = [8, 119], strides = [1, 1]} : vector<8x128xf32> to vector<8x119xf32>
    %138 = tpu.concatenate %136, %137 in 1 : vector<8x9xf32>, vector<8x119xf32> -> vector<8x128xf32>
    %c0_96 = arith.constant 0 : index
    %c0_97 = arith.constant 0 : index
    %139 = vector.load %arg2[%c0_96, %c0_97] : memref<72x128xf32, #tpu.memory_space<vmem>>, vector<8x128xf32>
    %140 = arith.mulf %138, %139 : vector<8x128xf32>
    %c0_98 = arith.constant 0 : index
    %c0_99 = arith.constant 0 : index
    %141 = vector.load %arg17[%c0_98, %c0_99] : memref<72x128xf32, #tpu.memory_space<vmem>>, vector<8x128xf32>
    tpu.vector_store %arg17[%c0_98, %c0_99], %140 {strides = array<i32>} : memref<72x128xf32, #tpu.memory_space<vmem>>, vector<8x128xf32>,
    %cst_100 = arith.constant 0.000000e+00 : f32
    %142 = vector.broadcast %cst_100 : f32 to vector<8x8xf32>
    %143 = vector.extract_strided_slice %135 {offsets = [0, 0], sizes = [8, 120], strides = [1, 1]} : vector<8x128xf32> to vector<8x120xf32>
    %144 = tpu.concatenate %142, %143 in 1 : vector<8x8xf32>, vector<8x120xf32> -> vector<8x128xf32>
    %c8_101 = arith.constant 8 : index
    %c0_102 = arith.constant 0 : index
    %145 = vector.load %arg2[%c8_101, %c0_102] : memref<72x128xf32, #tpu.memory_space<vmem>>, vector<8x128xf32>
    %146 = arith.mulf %144, %145 : vector<8x128xf32>
    %c8_103 = arith.constant 8 : index
    %c0_104 = arith.constant 0 : index
    %147 = vector.load %arg17[%c8_103, %c0_104] : memref<72x128xf32, #tpu.memory_space<vmem>>, vector<8x128xf32>
    tpu.vector_store %arg17[%c8_103, %c0_104], %146 {strides = array<i32>} : memref<72x128xf32, #tpu.memory_space<vmem>>, vector<8x128xf32>,
    %cst_105 = arith.constant 0.000000e+00 : f32
    %148 = vector.broadcast %cst_105 : f32 to vector<8x7xf32>
    %149 = vector.extract_strided_slice %135 {offsets = [0, 0], sizes = [8, 121], strides = [1, 1]} : vector<8x128xf32> to vector<8x121xf32>
    %150 = tpu.concatenate %148, %149 in 1 : vector<8x7xf32>, vector<8x121xf32> -> vector<8x128xf32>
    %c16_106 = arith.constant 16 : index
    %c0_107 = arith.constant 0 : index
    %151 = vector.load %arg2[%c16_106, %c0_107] : memref<72x128xf32, #tpu.memory_space<vmem>>, vector<8x128xf32>
    %152 = arith.mulf %150, %151 : vector<8x128xf32>
    %c16_108 = arith.constant 16 : index
    %c0_109 = arith.constant 0 : index
    %153 = vector.load %arg17[%c16_108, %c0_109] : memref<72x128xf32, #tpu.memory_space<vmem>>, vector<8x128xf32>
    tpu.vector_store %arg17[%c16_108, %c0_109], %152 {strides = array<i32>} : memref<72x128xf32, #tpu.memory_space<vmem>>, vector<8x128xf32>,
    %cst_110 = arith.constant 0.000000e+00 : f32
    %154 = vector.broadcast %cst_110 : f32 to vector<8x1xf32>
    %155 = vector.extract_strided_slice %135 {offsets = [0, 0], sizes = [8, 127], strides = [1, 1]} : vector<8x128xf32> to vector<8x127xf32>
    %156 = tpu.concatenate %154, %155 in 1 : vector<8x1xf32>, vector<8x127xf32> -> vector<8x128xf32>
    %c24_111 = arith.constant 24 : index
    %c0_112 = arith.constant 0 : index
    %157 = vector.load %arg2[%c24_111, %c0_112] : memref<72x128xf32, #tpu.memory_space<vmem>>, vector<8x128xf32>
    %158 = arith.mulf %156, %157 : vector<8x128xf32>
    %c24_113 = arith.constant 24 : index
    %c0_114 = arith.constant 0 : index
    %159 = vector.load %arg17[%c24_113, %c0_114] : memref<72x128xf32, #tpu.memory_space<vmem>>, vector<8x128xf32>
    tpu.vector_store %arg17[%c24_113, %c0_114], %158 {strides = array<i32>} : memref<72x128xf32, #tpu.memory_space<vmem>>, vector<8x128xf32>,
    %c32_115 = arith.constant 32 : index
    %c0_116 = arith.constant 0 : index
    %160 = vector.load %arg2[%c32_115, %c0_116] : memref<72x128xf32, #tpu.memory_space<vmem>>, vector<8x128xf32>
    %161 = arith.mulf %135, %160 : vector<8x128xf32>
    %c32_117 = arith.constant 32 : index
    %c0_118 = arith.constant 0 : index
    %162 = vector.load %arg17[%c32_117, %c0_118] : memref<72x128xf32, #tpu.memory_space<vmem>>, vector<8x128xf32>
    tpu.vector_store %arg17[%c32_117, %c0_118], %161 {strides = array<i32>} : memref<72x128xf32, #tpu.memory_space<vmem>>, vector<8x128xf32>,
    %163 = vector.extract_strided_slice %135 {offsets = [0, 1], sizes = [8, 127], strides = [1, 1]} : vector<8x128xf32> to vector<8x127xf32>
    %cst_119 = arith.constant 0.000000e+00 : f32
    %164 = vector.broadcast %cst_119 : f32 to vector<8x1xf32>
    %165 = tpu.concatenate %163, %164 in 1 : vector<8x127xf32>, vector<8x1xf32> -> vector<8x128xf32>
    %c40_120 = arith.constant 40 : index
    %c0_121 = arith.constant 0 : index
    %166 = vector.load %arg2[%c40_120, %c0_121] : memref<72x128xf32, #tpu.memory_space<vmem>>, vector<8x128xf32>
    %167 = arith.mulf %165, %166 : vector<8x128xf32>
    %c40_122 = arith.constant 40 : index
    %c0_123 = arith.constant 0 : index
    %168 = vector.load %arg17[%c40_122, %c0_123] : memref<72x128xf32, #tpu.memory_space<vmem>>, vector<8x128xf32>
    tpu.vector_store %arg17[%c40_122, %c0_123], %167 {strides = array<i32>} : memref<72x128xf32, #tpu.memory_space<vmem>>, vector<8x128xf32>,
    %169 = vector.extract_strided_slice %135 {offsets = [0, 7], sizes = [8, 121], strides = [1, 1]} : vector<8x128xf32> to vector<8x121xf32>
    %cst_124 = arith.constant 0.000000e+00 : f32
    %170 = vector.broadcast %cst_124 : f32 to vector<8x7xf32>
    %171 = tpu.concatenate %169, %170 in 1 : vector<8x121xf32>, vector<8x7xf32> -> vector<8x128xf32>
    %c48_125 = arith.constant 48 : index
    %c0_126 = arith.constant 0 : index
    %172 = vector.load %arg2[%c48_125, %c0_126] : memref<72x128xf32, #tpu.memory_space<vmem>>, vector<8x128xf32>
    %173 = arith.mulf %171, %172 : vector<8x128xf32>
    %c48_127 = arith.constant 48 : index
    %c0_128 = arith.constant 0 : index
    %174 = vector.load %arg17[%c48_127, %c0_128] : memref<72x128xf32, #tpu.memory_space<vmem>>, vector<8x128xf32>
    tpu.vector_store %arg17[%c48_127, %c0_128], %173 {strides = array<i32>} : memref<72x128xf32, #tpu.memory_space<vmem>>, vector<8x128xf32>,
    %175 = vector.extract_strided_slice %135 {offsets = [0, 8], sizes = [8, 120], strides = [1, 1]} : vector<8x128xf32> to vector<8x120xf32>
    %cst_129 = arith.constant 0.000000e+00 : f32
    %176 = vector.broadcast %cst_129 : f32 to vector<8x8xf32>
    %177 = tpu.concatenate %175, %176 in 1 : vector<8x120xf32>, vector<8x8xf32> -> vector<8x128xf32>
    %c56_130 = arith.constant 56 : index
    %c0_131 = arith.constant 0 : index
    %178 = vector.load %arg2[%c56_130, %c0_131] : memref<72x128xf32, #tpu.memory_space<vmem>>, vector<8x128xf32>
    %179 = arith.mulf %177, %178 : vector<8x128xf32>
    %c56_132 = arith.constant 56 : index
    %c0_133 = arith.constant 0 : index
    %180 = vector.load %arg17[%c56_132, %c0_133] : memref<72x128xf32, #tpu.memory_space<vmem>>, vector<8x128xf32>
    tpu.vector_store %arg17[%c56_132, %c0_133], %179 {strides = array<i32>} : memref<72x128xf32, #tpu.memory_space<vmem>>, vector<8x128xf32>,
    %181 = vector.extract_strided_slice %135 {offsets = [0, 9], sizes = [8, 119], strides = [1, 1]} : vector<8x128xf32> to vector<8x119xf32>
    %cst_134 = arith.constant 0.000000e+00 : f32
    %182 = vector.broadcast %cst_134 : f32 to vector<8x9xf32>
    %183 = tpu.concatenate %181, %182 in 1 : vector<8x119xf32>, vector<8x9xf32> -> vector<8x128xf32>
    %c64_135 = arith.constant 64 : index
    %c0_136 = arith.constant 0 : index
    %184 = vector.load %arg2[%c64_135, %c0_136] : memref<72x128xf32, #tpu.memory_space<vmem>>, vector<8x128xf32>
    %185 = arith.mulf %183, %184 : vector<8x128xf32>
    %c64_137 = arith.constant 64 : index
    %c0_138 = arith.constant 0 : index
    %186 = vector.load %arg17[%c64_137, %c0_138] : memref<72x128xf32, #tpu.memory_space<vmem>>, vector<8x128xf32>
    tpu.vector_store %arg17[%c64_137, %c0_138], %185 {strides = array<i32>} : memref<72x128xf32, #tpu.memory_space<vmem>>, vector<8x128xf32>,
    %c0_139 = arith.constant 0 : index
    %c0_140 = arith.constant 0 : index
    %187 = vector.load %arg9[%c0_139, %c0_140] : memref<8x72xbf16, #tpu.memory_space<vmem>>, vector<8x72xbf16>
    %c0_141 = arith.constant 0 : index
    %c0_142 = arith.constant 0 : index
    %188 = vector.load %arg17[%c0_141, %c0_142] : memref<72x128xf32, #tpu.memory_space<vmem>>, vector<72x128xf32>
    %189 = arith.truncf %188 : vector<72x128xf32> to vector<72x128xbf16>
    %cst_143 = arith.constant dense<0.000000e+00> : vector<8x128xf32>
    %190 = tpu.matmul %187, %189, %cst_143 {dimension_numbers = #tpu.dot_dimension_numbers<[1], [0], [0], [1], [0, 0, 1, 1], [], []>} : vector<8x72xbf16>, vector<72x128xbf16>, vector<8x128xf32> -> vector<8x128xf32>
    %c0_144 = arith.constant 0 : index
    %c0_145 = arith.constant 0 : index
    %191 = vector.load %arg10[%c0_144, %c0_145] : memref<8x1xf32, #tpu.memory_space<vmem>>, vector<8x1xf32>
    %192 = vector.broadcast %191 : vector<8x1xf32> to vector<8x128xf32>
    %193 = arith.addf %190, %192 : vector<8x128xf32>
    %194 = arith.addf %193, %75 : vector<8x128xf32>
    %cst_146 = arith.constant 0.000000e+00 : f32
    %195 = vector.broadcast %cst_146 : f32 to vector<8x128xf32>
    %196 = arith.maximumf %194, %195 : vector<8x128xf32>
    %c0_147 = arith.constant 0 : index
    %c0_148 = arith.constant 0 : index
    %197 = vector.load %arg14[%c0_147, %c0_148] : memref<8x128xf32, #tpu.memory_space<vmem>>, vector<8x128xf32>
    tpu.vector_store %arg14[%c0_147, %c0_148], %196 {strides = array<i32>} : memref<8x128xf32, #tpu.memory_space<vmem>>, vector<8x128xf32>,
    %c0_149 = arith.constant 0 : index
    %c0_150 = arith.constant 0 : index
    %198 = vector.load %arg4[%c0_149, %c0_150] : memref<2x128xf32, #tpu.memory_space<vmem>>, vector<2x128xf32>
    %cst_151 = arith.constant dense<0.000000e+00> : vector<2x8xf32>
    %199 = tpu.matmul %198, %196, %cst_151 {dimension_numbers = #tpu.dot_dimension_numbers<[1], [1], [0], [0], [0, 0, 1, 0], [], []>} : vector<2x128xf32>, vector<8x128xf32>, vector<2x8xf32> -> vector<2x8xf32>
    %c0_152 = arith.constant 0 : index
    %c0_153 = arith.constant 0 : index
    %200 = vector.load %arg15[%c0_152, %c0_153] : memref<2x8xf32, #tpu.memory_space<vmem>>, vector<2x8xf32>
    tpu.vector_store %arg15[%c0_152, %c0_153], %199 {strides = array<i32>} : memref<2x8xf32, #tpu.memory_space<vmem>>, vector<2x8xf32>,
    %c0_154 = arith.constant 0 : index
    %c0_155 = arith.constant 0 : index
    %201 = vector.load %arg11[%c0_154, %c0_155] : memref<8x10xf32, #tpu.memory_space<vmem>>, vector<8x10xf32>
    %cst_156 = arith.constant dense<0.000000e+00> : vector<2x10xf32>
    %202 = tpu.matmul %199, %201, %cst_156 {dimension_numbers = #tpu.dot_dimension_numbers<[1], [0], [0], [1], [0, 0, 1, 1], [], []>} : vector<2x8xf32>, vector<8x10xf32>, vector<2x10xf32> -> vector<2x10xf32>
    %c0_157 = arith.constant 0 : index
    %c0_158 = arith.constant 0 : index
    %203 = vector.load %arg12[%c0_157, %c0_158] : memref<1x10xf32, #tpu.memory_space<vmem>>, vector<1x10xf32>
    %204 = vector.broadcast %203 : vector<1x10xf32> to vector<2x10xf32>
    %205 = arith.addf %202, %204 : vector<2x10xf32>
    %c0_159 = arith.constant 0 : index
    %c0_160 = arith.constant 0 : index
    %206 = vector.load %arg13[%c0_159, %c0_160] : memref<2x10xf32, #tpu.memory_space<vmem>>, vector<2x10xf32>
    tpu.vector_store %arg13[%c0_159, %c0_160], %205 {strides = array<i32>} : memref<2x10xf32, #tpu.memory_space<vmem>>, vector<2x10xf32>,
    return
  }
}

</mosaic_0001>

<llo_original>
// kernel: modified_resnet_forward.1
$region0: #{modified_resnet_forward.1}
  #allocation0 [shape = 'u32[]', space=smem, size = 0x4, offset = 0x4, fixed_abs, tag = 'smem constant byte address 0x4 - core index']
  #allocation1 [shape = 'u32[144,128]{1,0:T(1,128)}', space=vmem, size = 0x12000, scoped, tag = 'internal scratch']
  #allocation2 [shape = 'f32[9,512]{1,0:T(8,128)}', space=vmem, size = 0x8000, scoped, tag = 'scratch operand']
  #allocation3 [shape = 'f32[72,128]{1,0:T(8,128)}', space=vmem, size = 0x9000, scoped, tag = 'scratch operand']
  %s0 = inlined_call_operand.vmem [shape: f32[1,512], index: 0, kind: input, shape index: {}]
  %s1 = inlined_call_operand.vmem [shape: f32[9,512], index: 1, kind: input, shape index: {}]
  %s2 = inlined_call_operand.vmem [shape: f32[72,128], index: 2, kind: input, shape index: {}]
  %s3 = inlined_call_operand.vmem [shape: bf16[512,128], index: 3, kind: input, shape index: {}]
  %s4 = inlined_call_operand.vmem [shape: f32[2,128], index: 4, kind: input, shape index: {}]
  %s5 = inlined_call_operand.vmem [shape: bf16[8,9], index: 5, kind: input, shape index: {}]
  %s6 = inlined_call_operand.vmem [shape: f32[8,1], index: 6, kind: input, shape index: {}]
  %s7 = inlined_call_operand.vmem [shape: bf16[8,72], index: 7, kind: input, shape index: {}]
  %s8 = inlined_call_operand.vmem [shape: f32[8,1], index: 8, kind: input, shape index: {}]
  %s9 = inlined_call_operand.vmem [shape: bf16[8,72], index: 9, kind: input, shape index: {}]
  %s10 = inlined_call_operand.vmem [shape: f32[8,1], index: 10, kind: input, shape index: {}]
  %s11 = inlined_call_operand.vmem [shape: f32[8,10], index: 11, kind: input, shape index: {}]
  %s12 = inlined_call_operand.vmem [shape: f32[1,10], index: 12, kind: input, shape index: {}]
  %s13 = inlined_call_operand.hbm [shape: f32[2,10], index: 13, kind: output, shape index: {0}]
  %s14 = inlined_call_operand.vmem [shape: f32[8,128], index: 14, kind: output, shape index: {1}]
  %s15 = inlined_call_operand.hbm [shape: f32[2,8], index: 15, kind: output, shape index: {2}]
  %16 = xla_tuple %s13, %s14, %s15
  %s17 = sld [smem:[#allocation0]]
  $region78: #{modified_resnet_forward.1} parent=0
    _
  %s19 = ssub.s32 1, %s17
  %s20 = scalar_select 0, %s19, %s17
  $region1: #{modified_resnet_forward.1} parent=0
    #allocation4 [shape = 'u8[1024]{0}', space=vmem, size = 0x400, scoped, tag = 'output window, operand 0, single buffered']
    #allocation5 [shape = 's32[1]{0}', space=sflag, size = 0x4, scoped, tag = 'scoped memory for modified_resnet_forward.1']
    #allocation6 [shape = 'u8[1024]{0}', space=vmem, size = 0x400, scoped, tag = 'output window, operand 2, single buffered']
    #allocation7 [shape = 's32[1]{0}', space=sflag, size = 0x4, scoped, tag = 'scoped memory for modified_resnet_forward.1']
    %21 = vsyncpa [#allocation5], 0
    %22 = vsyncpa [#allocation7], 0
    // Predicated region
    $region2: #{modified_resnet_forward.1} parent=1 // pred_check
      _
    $region3: #{modified_resnet_forward.1} parent=1 // pred_check_branch
      %24 = sbr.rel (0) target = $region5
    $region4: #{modified_resnet_forward.1} parent=1 // pred_region
      _
    $region5: #{modified_resnet_forward.1} parent=1 // pred_fallthru
      _
    // Predicated region
    $region6: #{modified_resnet_forward.1} parent=1 // pred_check
      _
    $region7: #{modified_resnet_forward.1} parent=1 // pred_check_branch
      %26 = sbr.rel (0) target = $region9
    $region8: #{modified_resnet_forward.1} parent=1 // pred_region
      _
    $region9: #{modified_resnet_forward.1} parent=1 // pred_fallthru
      _
    // Predicated region
    $region10: #{modified_resnet_forward.1} parent=1 // pred_check
      _
    $region11: #{modified_resnet_forward.1} parent=1 // pred_check_branch
      %28 = sbr.rel (0) target = $region13
    $region12: #{modified_resnet_forward.1} parent=1 // pred_region
      _
    $region13: #{modified_resnet_forward.1} parent=1 // pred_fallthru
      _
    // Predicated region
    $region14: #{modified_resnet_forward.1} parent=1 // pred_check
      _
    $region15: #{modified_resnet_forward.1} parent=1 // pred_check_branch
      %30 = sbr.rel (0) target = $region17
    $region16: #{modified_resnet_forward.1} parent=1 // pred_region
      _
    $region17: #{modified_resnet_forward.1} parent=1 // pred_fallthru
      _
    // Predicated region
    $region18: #{modified_resnet_forward.1} parent=1 // pred_check
      _
    $region19: #{modified_resnet_forward.1} parent=1 // pred_check_branch
      %32 = sbr.rel (0) target = $region21
    $region20: #{modified_resnet_forward.1} parent=1 // pred_region
      _
    $region21: #{modified_resnet_forward.1} parent=1 // pred_fallthru
      _
    // Predicated region
    $region22: #{modified_resnet_forward.1} parent=1 // pred_check
      _
    $region23: #{modified_resnet_forward.1} parent=1 // pred_check_branch
      %34 = sbr.rel (0) target = $region25
    $region24: #{modified_resnet_forward.1} parent=1 // pred_region
      _
    $region25: #{modified_resnet_forward.1} parent=1 // pred_fallthru
      _
    // Predicated region
    $region26: #{modified_resnet_forward.1} parent=1 // pred_check
      _
    $region27: #{modified_resnet_forward.1} parent=1 // pred_check_branch
      %36 = sbr.rel (0) target = $region29
    $region28: #{modified_resnet_forward.1} parent=1 // pred_region
      _
    $region29: #{modified_resnet_forward.1} parent=1 // pred_fallthru
      _
    // Predicated region
    $region30: #{modified_resnet_forward.1} parent=1 // pred_check
      _
    $region31: #{modified_resnet_forward.1} parent=1 // pred_check_branch
      %38 = sbr.rel (0) target = $region33
    $region32: #{modified_resnet_forward.1} parent=1 // pred_region
      _
    $region33: #{modified_resnet_forward.1} parent=1 // pred_fallthru
      _
    // Predicated region
    $region34: #{modified_resnet_forward.1} parent=1 // pred_check
      _
    $region35: #{modified_resnet_forward.1} parent=1 // pred_check_branch
      %40 = sbr.rel (0) target = $region37
    $region36: #{modified_resnet_forward.1} parent=1 // pred_region
      _
    $region37: #{modified_resnet_forward.1} parent=1 // pred_fallthru
      _
    // Predicated region
    $region38: #{modified_resnet_forward.1} parent=1 // pred_check
      _
    $region39: #{modified_resnet_forward.1} parent=1 // pred_check_branch
      %42 = sbr.rel (0) target = $region41
    $region40: #{modified_resnet_forward.1} parent=1 // pred_region
      _
    $region41: #{modified_resnet_forward.1} parent=1 // pred_fallthru
      _
    // Predicated region
    $region42: #{modified_resnet_forward.1} parent=1 // pred_check
      _
    $region43: #{modified_resnet_forward.1} parent=1 // pred_check_branch
      %44 = sbr.rel (0) target = $region45
    $region44: #{modified_resnet_forward.1} parent=1 // pred_region
      _
    $region45: #{modified_resnet_forward.1} parent=1 // pred_fallthru
      _
    // Predicated region
    $region46: #{modified_resnet_forward.1} parent=1 // pred_check
      _
    $region47: #{modified_resnet_forward.1} parent=1 // pred_check_branch
      %46 = sbr.rel (0) target = $region49
    $region48: #{modified_resnet_forward.1} parent=1 // pred_region
      _
    $region49: #{modified_resnet_forward.1} parent=1 // pred_fallthru
      _
    // Predicated region
    $region50: #{modified_resnet_forward.1} parent=1 // pred_check
      _
    $region51: #{modified_resnet_forward.1} parent=1 // pred_check_branch
      %48 = sbr.rel (0) target = $region53
    $region52: #{modified_resnet_forward.1} parent=1 // pred_region
      _
    $region53: #{modified_resnet_forward.1} parent=1 // pred_fallthru
      _
    %v50 = vld [vmem:[%s0] sm:$0xf]
    %v52 = vlaneseq
    %v53 = vshrl.u32 %v52, 7
    %v54 = vsub.s32 0, %v53
    %v55 = vrot.slane %v50, %v54
    %v56 = vlaneseq
    %v57 = vshrl.u32 %v56, 7
    %v58 = vsub.s32 1, %v57
    %v59 = vrot.slane %v50, %v58
    %v60 = vlaneseq
    %v61 = vshrl.u32 %v60, 7
    %v62 = vsub.s32 2, %v61
    %v63 = vrot.slane %v50, %v62
    %v64 = vlaneseq
    %v65 = vshrl.u32 %v64, 7
    %v66 = vsub.s32 3, %v65
    %v67 = vrot.slane %v50, %v66
    %68 = vrot.lane.b32.xlu0 %v55, 17
    %v69 = vpop.permute.xlu0 %68
    %70 = vrot.lane.b32.xlu0 %v59, 17
    %v71 = vpop.permute.xlu0 %70
    %72 = vrot.lane.b32.xlu0 %v63, 17
    %v73 = vpop.permute.xlu0 %72
    %74 = vrot.lane.b32.xlu0 %v67, 17
    %v75 = vpop.permute.xlu0 %74
    %vm76 = vcmask 138240
    %v77 = vsel %vm76, %v69, %v71
    %v78 = vsel %vm76, %v71, %v73
    %v79 = vsel %vm76, %v73, %v75
    %v84 = vsel %vm76, 0.0, %v69
    %v85 = vld [vmem:[%s1] ss:$8 sm:$0xf]
    %v87 = vlaneseq
    %v88 = vshrl.u32 %v87, 7
    %v89 = vsub.s32 0, %v88
    %v90 = vrot.slane %v85, %v89
    %v91 = vlaneseq
    %v92 = vshrl.u32 %v91, 7
    %v93 = vsub.s32 1, %v92
    %v94 = vrot.slane %v85, %v93
    %v95 = vlaneseq
    %v96 = vshrl.u32 %v95, 7
    %v97 = vsub.s32 2, %v96
    %v98 = vrot.slane %v85, %v97
    %v99 = vlaneseq
    %v100 = vshrl.u32 %v99, 7
    %v101 = vsub.s32 3, %v100
    %v102 = vrot.slane %v85, %v101
    %v107 = vmul.f32 %v84, %v90
    %v108 = vmul.f32 %v77, %v94
    %v109 = vmul.f32 %v78, %v98
    %v110 = vmul.f32 %v79, %v102
    %v115 = vcombine.low %v107, %v108
    %v116 = vcombine.low %v109, %v110
    %v118 = vunpack.c.l.s4 1966171168
    %v119 = vunpack.c.0.s8 %v118
    %v120 = vlaneseq
    %v121 = vshrl.u32 %v120, 7
    %v122 = vsub.s32 %v119, %v121
    %v123 = vrot.slane %v115, %v122
    %v125 = vunpack.c.l.s4 1966171168
    %v126 = vunpack.c.0.s8 %v125
    %v127 = vlaneseq
    %v128 = vshrl.u32 %v127, 7
    %v129 = vsub.s32 %v126, %v128
    %v130 = vrot.slane %v116, %v129
    %v131 = vcombine.low %v123, %v130
    %v133 = vunpack.c.l.s4 1966171168
    %v134 = vunpack.c.0.s8 %v133
    %v135 = vlaneseq
    %v136 = vshrl.u32 %v135, 7
    %v137 = vsub.s32 %v134, %v136
    %v138 = vrot.slane %v131, %v137
    %v140 = vlaneseq
    %vm141 = vcmp.ge.s32.totalorder %v140, 0
    %vm142 = vcmp.lt.s32.totalorder %v140, 512
    %vm143 = vmand %vm141, %vm142
    %144 = vst.msk [vmem:[#allocation2] ss:$8 sm:$0xf] %vm143, %v138
    %145 = vst.msk [vmem:[#allocation2] ss:$8 sm:$0x0] %vm143, %v138
    %146 = vrot.lane.b32.xlu0 %v55, 16
    %v147 = vpop.permute.xlu0 %146
    %148 = vrot.lane.b32.xlu0 %v59, 16
    %v149 = vpop.permute.xlu0 %148
    %150 = vrot.lane.b32.xlu0 %v63, 16
    %v151 = vpop.permute.xlu0 %150
    %152 = vrot.lane.b32.xlu0 %v67, 16
    %v153 = vpop.permute.xlu0 %152
    %vm154 = vcmask 130048
    %v155 = vsel %vm154, %v147, %v149
    %v156 = vsel %vm154, %v149, %v151
    %v157 = vsel %vm154, %v151, %v153
    %v162 = vsel %vm154, 0.0, %v147
    %s163 = scalar_lea.vmem %s1, 1
    %v164 = vld [vmem:[%s163] ss:$8 sm:$0xf]
    %v166 = vlaneseq
    %v167 = vshrl.u32 %v166, 7
    %v168 = vsub.s32 0, %v167
    %v169 = vrot.slane %v164, %v168
    %v170 = vlaneseq
    %v171 = vshrl.u32 %v170, 7
    %v172 = vsub.s32 1, %v171
    %v173 = vrot.slane %v164, %v172
    %v174 = vlaneseq
    %v175 = vshrl.u32 %v174, 7
    %v176 = vsub.s32 2, %v175
    %v177 = vrot.slane %v164, %v176
    %v178 = vlaneseq
    %v179 = vshrl.u32 %v178, 7
    %v180 = vsub.s32 3, %v179
    %v181 = vrot.slane %v164, %v180
    %v186 = vmul.f32 %v162, %v169
    %v187 = vmul.f32 %v155, %v173
    %v188 = vmul.f32 %v156, %v177
    %v189 = vmul.f32 %v157, %v181
    %v194 = vcombine.low %v186, %v187
    %v195 = vcombine.low %v188, %v189
    %v197 = vunpack.c.l.s4 1966171168
    %v198 = vunpack.c.0.s8 %v197
    %v199 = vlaneseq
    %v200 = vshrl.u32 %v199, 7
    %v201 = vsub.s32 %v198, %v200
    %v202 = vrot.slane %v194, %v201
    %v204 = vunpack.c.l.s4 1966171168
    %v205 = vunpack.c.0.s8 %v204
    %v206 = vlaneseq
    %v207 = vshrl.u32 %v206, 7
    %v208 = vsub.s32 %v205, %v207
    %v209 = vrot.slane %v195, %v208
    %v210 = vcombine.low %v202, %v209
    %v212 = vunpack.c.l.s4 1966171168
    %v213 = vunpack.c.0.s8 %v212
    %v214 = vlaneseq
    %v215 = vshrl.u32 %v214, 7
    %v216 = vsub.s32 %v213, %v215
    %v217 = vrot.slane %v210, %v216
    %s219 = scalar_lea.vmem [#allocation2], 1
    %220 = vst.msk [vmem:[%s219] ss:$8 sm:$0xf] %vm143, %v217
    %221 = vst.msk [vmem:[%s219] ss:$8 sm:$0x0] %vm143, %v217
    %222 = vrot.lane.b32.xlu0 %v55, 15
    %v223 = vpop.permute.xlu0 %222
    %224 = vrot.lane.b32.xlu0 %v59, 15
    %v225 = vpop.permute.xlu0 %224
    %226 = vrot.lane.b32.xlu0 %v63, 15
    %v227 = vpop.permute.xlu0 %226
    %228 = vrot.lane.b32.xlu0 %v67, 15
    %v229 = vpop.permute.xlu0 %228
    %vm230 = vcmask 121856
    %v231 = vsel %vm230, %v223, %v225
    %v232 = vsel %vm230, %v225, %v227
    %v233 = vsel %vm230, %v227, %v229
    %v238 = vsel %vm230, 0.0, %v223
    %s239 = scalar_lea.vmem %s1, 2
    %v240 = vld [vmem:[%s239] ss:$8 sm:$0xf]
    %v242 = vlaneseq
    %v243 = vshrl.u32 %v242, 7
    %v244 = vsub.s32 0, %v243
    %v245 = vrot.slane %v240, %v244
    %v246 = vlaneseq
    %v247 = vshrl.u32 %v246, 7
    %v248 = vsub.s32 1, %v247
    %v249 = vrot.slane %v240, %v248
    %v250 = vlaneseq
    %v251 = vshrl.u32 %v250, 7
    %v252 = vsub.s32 2, %v251
    %v253 = vrot.slane %v240, %v252
    %v254 = vlaneseq
    %v255 = vshrl.u32 %v254, 7
    %v256 = vsub.s32 3, %v255
    %v257 = vrot.slane %v240, %v256
    %v262 = vmul.f32 %v238, %v245
    %v263 = vmul.f32 %v231, %v249
    %v264 = vmul.f32 %v232, %v253
    %v265 = vmul.f32 %v233, %v257
    %v270 = vcombine.low %v262, %v263
    %v271 = vcombine.low %v264, %v265
    %v273 = vunpack.c.l.s4 1966171168
    %v274 = vunpack.c.0.s8 %v273
    %v275 = vlaneseq
    %v276 = vshrl.u32 %v275, 7
    %v277 = vsub.s32 %v274, %v276
    %v278 = vrot.slane %v270, %v277
    %v280 = vunpack.c.l.s4 1966171168
    %v281 = vunpack.c.0.s8 %v280
    %v282 = vlaneseq
    %v283 = vshrl.u32 %v282, 7
    %v284 = vsub.s32 %v281, %v283
    %v285 = vrot.slane %v271, %v284
    %v286 = vcombine.low %v278, %v285
    %v288 = vunpack.c.l.s4 1966171168
    %v289 = vunpack.c.0.s8 %v288
    %v290 = vlaneseq
    %v291 = vshrl.u32 %v290, 7
    %v292 = vsub.s32 %v289, %v291
    %v293 = vrot.slane %v286, %v292
    %s295 = scalar_lea.vmem [#allocation2], 2
    %296 = vst.msk [vmem:[%s295] ss:$8 sm:$0xf] %vm143, %v293
    %297 = vst.msk [vmem:[%s295] ss:$8 sm:$0x0] %vm143, %v293
    %298 = vrot.lane.b32.xlu0 %v55, 1
    %v299 = vpop.permute.xlu0 %298
    %300 = vrot.lane.b32.xlu0 %v59, 1
    %v301 = vpop.permute.xlu0 %300
    %302 = vrot.lane.b32.xlu0 %v63, 1
    %v303 = vpop.permute.xlu0 %302
    %304 = vrot.lane.b32.xlu0 %v67, 1
    %v305 = vpop.permute.xlu0 %304
    %vm306 = vcmask 7168
    %v307 = vsel %vm306, %v299, %v301
    %v308 = vsel %vm306, %v301, %v303
    %v309 = vsel %vm306, %v303, %v305
    %v314 = vsel %vm306, 0.0, %v299
    %s315 = scalar_lea.vmem %s1, 3
    %v316 = vld [vmem:[%s315] ss:$8 sm:$0xf]
    %v318 = vlaneseq
    %v319 = vshrl.u32 %v318, 7
    %v320 = vsub.s32 0, %v319
    %v321 = vrot.slane %v316, %v320
    %v322 = vlaneseq
    %v323 = vshrl.u32 %v322, 7
    %v324 = vsub.s32 1, %v323
    %v325 = vrot.slane %v316, %v324
    %v326 = vlaneseq
    %v327 = vshrl.u32 %v326, 7
    %v328 = vsub.s32 2, %v327
    %v329 = vrot.slane %v316, %v328
    %v330 = vlaneseq
    %v331 = vshrl.u32 %v330, 7
    %v332 = vsub.s32 3, %v331
    %v333 = vrot.slane %v316, %v332
    %v338 = vmul.f32 %v314, %v321
    %v339 = vmul.f32 %v307, %v325
    %v340 = vmul.f32 %v308, %v329
    %v341 = vmul.f32 %v309, %v333
    %v346 = vcombine.low %v338, %v339
    %v347 = vcombine.low %v340, %v341
    %v349 = vunpack.c.l.s4 1966171168
    %v350 = vunpack.c.0.s8 %v349
    %v351 = vlaneseq
    %v352 = vshrl.u32 %v351, 7
    %v353 = vsub.s32 %v350, %v352
    %v354 = vrot.slane %v346, %v353
    %v356 = vunpack.c.l.s4 1966171168
    %v357 = vunpack.c.0.s8 %v356
    %v358 = vlaneseq
    %v359 = vshrl.u32 %v358, 7
    %v360 = vsub.s32 %v357, %v359
    %v361 = vrot.slane %v347, %v360
    %v362 = vcombine.low %v354, %v361
    %v364 = vunpack.c.l.s4 1966171168
    %v365 = vunpack.c.0.s8 %v364
    %v366 = vlaneseq
    %v367 = vshrl.u32 %v366, 7
    %v368 = vsub.s32 %v365, %v367
    %v369 = vrot.slane %v362, %v368
    %s371 = scalar_lea.vmem [#allocation2], 3
    %372 = vst.msk [vmem:[%s371] ss:$8 sm:$0xf] %vm143, %v369
    %373 = vst.msk [vmem:[%s371] ss:$8 sm:$0x0] %vm143, %v369
    %s374 = scalar_lea.vmem %s1, 4
    %v375 = vld [vmem:[%s374] ss:$8 sm:$0xf]
    %v376 = vmul.f32 %v50, %v375
    %s377 = scalar_lea.vmem [#allocation2], 4
    %378 = vst.msk [vmem:[%s377] ss:$8 sm:$0xf] %vm143, %v376
    %379 = vst.msk [vmem:[%s377] ss:$8 sm:$0x0] %vm143, %v376
    %380 = vrot.lane.b32.xlu0 %v55, 127
    %v381 = vpop.permute.xlu0 %380
    %382 = vrot.lane.b32.xlu0 %v59, 127
    %v383 = vpop.permute.xlu0 %382
    %384 = vrot.lane.b32.xlu0 %v63, 127
    %v385 = vpop.permute.xlu0 %384
    %386 = vrot.lane.b32.xlu0 %v67, 127
    %v387 = vpop.permute.xlu0 %386
    %vm388 = vcmask 1039360
    %v389 = vsel %vm388, %v381, %v383
    %v390 = vsel %vm388, %v383, %v385
    %v391 = vsel %vm388, %v385, %v387
    %v396 = vsel %vm388, %v387, 0.0
    %s397 = scalar_lea.vmem %s1, 5
    %v398 = vld [vmem:[%s397] ss:$8 sm:$0xf]
    %v400 = vlaneseq
    %v401 = vshrl.u32 %v400, 7
    %v402 = vsub.s32 0, %v401
    %v403 = vrot.slane %v398, %v402
    %v404 = vlaneseq
    %v405 = vshrl.u32 %v404, 7
    %v406 = vsub.s32 1, %v405
    %v407 = vrot.slane %v398, %v406
    %v408 = vlaneseq
    %v409 = vshrl.u32 %v408, 7
    %v410 = vsub.s32 2, %v409
    %v411 = vrot.slane %v398, %v410
    %v412 = vlaneseq
    %v413 = vshrl.u32 %v412, 7
    %v414 = vsub.s32 3, %v413
    %v415 = vrot.slane %v398, %v414
    %v420 = vmul.f32 %v389, %v403
    %v421 = vmul.f32 %v390, %v407
    %v422 = vmul.f32 %v391, %v411
    %v423 = vmul.f32 %v396, %v415
    %v428 = vcombine.low %v420, %v421
    %v429 = vcombine.low %v422, %v423
    %v431 = vunpack.c.l.s4 1966171168
    %v432 = vunpack.c.0.s8 %v431
    %v433 = vlaneseq
    %v434 = vshrl.u32 %v433, 7
    %v435 = vsub.s32 %v432, %v434
    %v436 = vrot.slane %v428, %v435
    %v438 = vunpack.c.l.s4 1966171168
    %v439 = vunpack.c.0.s8 %v438
    %v440 = vlaneseq
    %v441 = vshrl.u32 %v440, 7
    %v442 = vsub.s32 %v439, %v441
    %v443 = vrot.slane %v429, %v442
    %v444 = vcombine.low %v436, %v443
    %v446 = vunpack.c.l.s4 1966171168
    %v447 = vunpack.c.0.s8 %v446
    %v448 = vlaneseq
    %v449 = vshrl.u32 %v448, 7
    %v450 = vsub.s32 %v447, %v449
    %v451 = vrot.slane %v444, %v450
    %s453 = scalar_lea.vmem [#allocation2], 5
    %454 = vst.msk [vmem:[%s453] ss:$8 sm:$0xf] %vm143, %v451
    %455 = vst.msk [vmem:[%s453] ss:$8 sm:$0x0] %vm143, %v451
    %456 = vrot.lane.b32.xlu0 %v55, 113
    %v457 = vpop.permute.xlu0 %456
    %458 = vrot.lane.b32.xlu0 %v59, 113
    %v459 = vpop.permute.xlu0 %458
    %460 = vrot.lane.b32.xlu0 %v63, 113
    %v461 = vpop.permute.xlu0 %460
    %462 = vrot.lane.b32.xlu0 %v67, 113
    %v463 = vpop.permute.xlu0 %462
    %vm464 = vcmask 924672
    %v465 = vsel %vm464, %v457, %v459
    %v466 = vsel %vm464, %v459, %v461
    %v467 = vsel %vm464, %v461, %v463
    %v472 = vsel %vm464, %v463, 0.0
    %s473 = scalar_lea.vmem %s1, 6
    %v474 = vld [vmem:[%s473] ss:$8 sm:$0xf]
    %v476 = vlaneseq
    %v477 = vshrl.u32 %v476, 7
    %v478 = vsub.s32 0, %v477
    %v479 = vrot.slane %v474, %v478
    %v480 = vlaneseq
    %v481 = vshrl.u32 %v480, 7
    %v482 = vsub.s32 1, %v481
    %v483 = vrot.slane %v474, %v482
    %v484 = vlaneseq
    %v485 = vshrl.u32 %v484, 7
    %v486 = vsub.s32 2, %v485
    %v487 = vrot.slane %v474, %v486
    %v488 = vlaneseq
    %v489 = vshrl.u32 %v488, 7
    %v490 = vsub.s32 3, %v489
    %v491 = vrot.slane %v474, %v490
    %v496 = vmul.f32 %v465, %v479
    %v497 = vmul.f32 %v466, %v483
    %v498 = vmul.f32 %v467, %v487
    %v499 = vmul.f32 %v472, %v491
    %v504 = vcombine.low %v496, %v497
    %v505 = vcombine.low %v498, %v499
    %v507 = vunpack.c.l.s4 1966171168
    %v508 = vunpack.c.0.s8 %v507
    %v509 = vlaneseq
    %v510 = vshrl.u32 %v509, 7
    %v511 = vsub.s32 %v508, %v510
    %v512 = vrot.slane %v504, %v511
    %v514 = vunpack.c.l.s4 1966171168
    %v515 = vunpack.c.0.s8 %v514
    %v516 = vlaneseq
    %v517 = vshrl.u32 %v516, 7
    %v518 = vsub.s32 %v515, %v517
    %v519 = vrot.slane %v505, %v518
    %v520 = vcombine.low %v512, %v519
    %v522 = vunpack.c.l.s4 1966171168
    %v523 = vunpack.c.0.s8 %v522
    %v524 = vlaneseq
    %v525 = vshrl.u32 %v524, 7
    %v526 = vsub.s32 %v523, %v525
    %v527 = vrot.slane %v520, %v526
    %s529 = scalar_lea.vmem [#allocation2], 6
    %530 = vst.msk [vmem:[%s529] ss:$8 sm:$0xf] %vm143, %v527
    %531 = vst.msk [vmem:[%s529] ss:$8 sm:$0x0] %vm143, %v527
    %532 = vrot.lane.b32.xlu0 %v55, 112
    %v533 = vpop.permute.xlu0 %532
    %534 = vrot.lane.b32.xlu0 %v59, 112
    %v535 = vpop.permute.xlu0 %534
    %536 = vrot.lane.b32.xlu0 %v63, 112
    %v537 = vpop.permute.xlu0 %536
    %538 = vrot.lane.b32.xlu0 %v67, 112
    %v539 = vpop.permute.xlu0 %538
    %vm540 = vcmask 916480
    %v541 = vsel %vm540, %v533, %v535
    %v542 = vsel %vm540, %v535, %v537
    %v543 = vsel %vm540, %v537, %v539
    %v548 = vsel %vm540, %v539, 0.0
    %s549 = scalar_lea.vmem %s1, 7
    %v550 = vld [vmem:[%s549] ss:$8 sm:$0xf]
    %v552 = vlaneseq
    %v553 = vshrl.u32 %v552, 7
    %v554 = vsub.s32 0, %v553
    %v555 = vrot.slane %v550, %v554
    %v556 = vlaneseq
    %v557 = vshrl.u32 %v556, 7
    %v558 = vsub.s32 1, %v557
    %v559 = vrot.slane %v550, %v558
    %v560 = vlaneseq
    %v561 = vshrl.u32 %v560, 7
    %v562 = vsub.s32 2, %v561
    %v563 = vrot.slane %v550, %v562
    %v564 = vlaneseq
    %v565 = vshrl.u32 %v564, 7
    %v566 = vsub.s32 3, %v565
    %v567 = vrot.slane %v550, %v566
    %v572 = vmul.f32 %v541, %v555
    %v573 = vmul.f32 %v542, %v559
    %v574 = vmul.f32 %v543, %v563
    %v575 = vmul.f32 %v548, %v567
    %v580 = vcombine.low %v572, %v573
    %v581 = vcombine.low %v574, %v575
    %v583 = vunpack.c.l.s4 1966171168
    %v584 = vunpack.c.0.s8 %v583
    %v585 = vlaneseq
    %v586 = vshrl.u32 %v585, 7
    %v587 = vsub.s32 %v584, %v586
    %v588 = vrot.slane %v580, %v587
    %v590 = vunpack.c.l.s4 1966171168
    %v591 = vunpack.c.0.s8 %v590
    %v592 = vlaneseq
    %v593 = vshrl.u32 %v592, 7
    %v594 = vsub.s32 %v591, %v593
    %v595 = vrot.slane %v581, %v594
    %v596 = vcombine.low %v588, %v595
    %v598 = vunpack.c.l.s4 1966171168
    %v599 = vunpack.c.0.s8 %v598
    %v600 = vlaneseq
    %v601 = vshrl.u32 %v600, 7
    %v602 = vsub.s32 %v599, %v601
    %v603 = vrot.slane %v596, %v602
    %s605 = scalar_lea.vmem [#allocation2], 7
    %606 = vst.msk [vmem:[%s605] ss:$8 sm:$0xf] %vm143, %v603
    %607 = vst.msk [vmem:[%s605] ss:$8 sm:$0x0] %vm143, %v603
    %608 = vrot.lane.b32.xlu0 %v55, 111
    %v609 = vpop.permute.xlu0 %608
    %610 = vrot.lane.b32.xlu0 %v59, 111
    %v611 = vpop.permute.xlu0 %610
    %612 = vrot.lane.b32.xlu0 %v63, 111
    %v613 = vpop.permute.xlu0 %612
    %614 = vrot.lane.b32.xlu0 %v67, 111
    %v615 = vpop.permute.xlu0 %614
    %vm616 = vcmask 908288
    %v617 = vsel %vm616, %v609, %v611
    %v618 = vsel %vm616, %v611, %v613
    %v619 = vsel %vm616, %v613, %v615
    %v624 = vsel %vm616, %v615, 0.0
    %s625 = scalar_lea.vmem %s1, 32
    %v626 = vld [vmem:[%s625] ss:$8 sm:$0xf]
    %v628 = vlaneseq
    %v629 = vshrl.u32 %v628, 7
    %v630 = vsub.s32 0, %v629
    %v631 = vrot.slane %v626, %v630
    %v632 = vlaneseq
    %v633 = vshrl.u32 %v632, 7
    %v634 = vsub.s32 1, %v633
    %v635 = vrot.slane %v626, %v634
    %v636 = vlaneseq
    %v637 = vshrl.u32 %v636, 7
    %v638 = vsub.s32 2, %v637
    %v639 = vrot.slane %v626, %v638
    %v640 = vlaneseq
    %v641 = vshrl.u32 %v640, 7
    %v642 = vsub.s32 3, %v641
    %v643 = vrot.slane %v626, %v642
    %v648 = vmul.f32 %v617, %v631
    %v649 = vmul.f32 %v618, %v635
    %v650 = vmul.f32 %v619, %v639
    %v651 = vmul.f32 %v624, %v643
    %v656 = vcombine.low %v648, %v649
    %v657 = vcombine.low %v650, %v651
    %v659 = vunpack.c.l.s4 1966171168
    %v660 = vunpack.c.0.s8 %v659
    %v661 = vlaneseq
    %v662 = vshrl.u32 %v661, 7
    %v663 = vsub.s32 %v660, %v662
    %v664 = vrot.slane %v656, %v663
    %v666 = vunpack.c.l.s4 1966171168
    %v667 = vunpack.c.0.s8 %v666
    %v668 = vlaneseq
    %v669 = vshrl.u32 %v668, 7
    %v670 = vsub.s32 %v667, %v669
    %v671 = vrot.slane %v657, %v670
    %v672 = vcombine.low %v664, %v671
    %v674 = vunpack.c.l.s4 1966171168
    %v675 = vunpack.c.0.s8 %v674
    %v676 = vlaneseq
    %v677 = vshrl.u32 %v676, 7
    %v678 = vsub.s32 %v675, %v677
    %v679 = vrot.slane %v672, %v678
    %s681 = scalar_lea.vmem [#allocation2], 32
    %682 = vst.msk [vmem:[%s681] ss:$8 sm:$0xf] %vm143, %v679
    %683 = vst.msk [vmem:[%s681] ss:$8 sm:$0x0] %vm143, %v679
    %v684 = vld [vmem:[%s5] sm:$0xf]
    %v685 = vld [vmem:[#allocation2] sm:$0xff]
    %v686 = vld [vmem:[#allocation2 + $0x8] sm:$0xff]
    %v687 = vld [vmem:[#allocation2 + $0x10] sm:$0xff]
    %v688 = vld [vmem:[#allocation2 + $0x18] sm:$0xff]
    %v689 = vld [vmem:[#allocation2 + $0x20] sm:$0x1]
    %v690 = vld [vmem:[#allocation2 + $0x28] sm:$0x1]
    %v691 = vld [vmem:[#allocation2 + $0x30] sm:$0x1]
    %v692 = vld [vmem:[#allocation2 + $0x38] sm:$0x1]
    %v693 = vpack.c.bf16 %v689, %v685
    %v694 = vpack.c.bf16 %v690, %v686
    %v695 = vpack.c.bf16 %v691, %v687
    %v696 = vpack.c.bf16 %v692, %v688
    %v697 = vld [vmem:[%s6] sm:$0xff]
    %699 = vset.pattern.permute.xlu0 0
    %700 = vperm.xlu0 %699, %v697
    %v701 = vpop.permute.xlu0 %700
    %vm703 = vcmask 72704
    %v705 = vsel %vm703, %v684, 0
    %vm707 = vcmask 1043456
    %vm708 = vcmask 1044480
    %v709 = vsel %vm707, 4294967295, 65535
    %v710 = vsel %vm708, %v709, 0
    %v712 = vand.u32 %v693, %v710
    %v715 = vand.u32 %v694, %v710
    %v718 = vand.u32 %v695, %v710
    %v721 = vand.u32 %v696, %v710
    %723 = vmatprep.subr.bf16.mxu0 %v715
    %724 = vmatpush1.bf16.msra.mxu0 %v712
    %725 = vmatprep.subr.bf16.mxu0 0
    %726 = vmatpush1.bf16.msra.mxu0 0
    %727 = vmatprep.subr.bf16.mxu0 0
    %728 = vmatpush1.bf16.msra.mxu0 0
    %729 = vmatprep.subr.bf16.mxu0 0
    %730 = vmatpush1.bf16.msra.mxu0 0
    %731 = vmatprep.subr.bf16.mxu0 0
    %732 = vmatpush1.bf16.msra.mxu0 0
    %733 = vmatprep.subr.bf16.mxu0 0
    %734 = vmatpush1.bf16.msra.mxu0 0
    %735 = vmatprep.subr.bf16.mxu0 0
    %736 = vmatpush1.bf16.msra.mxu0 0
    %737 = vmatprep.subr.bf16.mxu0 0
    %738 = vmatpush1.bf16.msra.mxu0 0
    %739 = vmatprep.subr.bf16.mxu0 0
    %740 = vmatpush1.bf16.msra.mxu0 0
    %741 = vmatprep.subr.bf16.mxu0 0
    %742 = vmatpush1.bf16.msra.mxu0 0
    %743 = vmatprep.subr.bf16.mxu0 0
    %744 = vmatpush1.bf16.msra.mxu0 0
    %745 = vmatprep.subr.bf16.mxu0 0
    %746 = vmatpush1.bf16.msra.mxu0 0
    %747 = vmatprep.subr.bf16.mxu0 0
    %748 = vmatpush1.bf16.msra.mxu0 0
    %749 = vmatprep.subr.bf16.mxu0 0
    %750 = vmatpush1.bf16.msra.mxu0 0
    %751 = vmatprep.subr.bf16.mxu0 0
    %752 = vmatpush1.bf16.msra.mxu0 0
    %753 = vmatprep.subr.bf16.mxu0 0
    %754 = vmatpush1.bf16.msra.mxu0 0
    %755 = vmatprep.mubr.bf16.mxu0 0
    %756 = vmatmul.mubr.bf16.gmra.mrb[0].mxu0 %v705
    %v757 = vpop.f32.mrb[0].mxu0
    %v758 = vadd.f32 %v701, %v757
    %v759 = vpop.f32.mrb[0].mxu0
    %v760 = vadd.f32 %v701, %v759
    %v761 = vpop.f32.mrb[0].mxu0
    %v762 = vpop.f32.mrb[0].mxu0
    %763 = vdwg.mxu0
    %764 = vmatprep.subr.bf16.mxu0 %v721
    %765 = vmatpush1.bf16.msra.mxu0 %v718
    %766 = vmatprep.subr.bf16.mxu0 0
    %767 = vmatpush1.bf16.msra.mxu0 0
    %768 = vmatprep.subr.bf16.mxu0 0
    %769 = vmatpush1.bf16.msra.mxu0 0
    %770 = vmatprep.subr.bf16.mxu0 0
    %771 = vmatpush1.bf16.msra.mxu0 0
    %772 = vmatprep.subr.bf16.mxu0 0
    %773 = vmatpush1.bf16.msra.mxu0 0
    %774 = vmatprep.subr.bf16.mxu0 0
    %775 = vmatpush1.bf16.msra.mxu0 0
    %776 = vmatprep.subr.bf16.mxu0 0
    %777 = vmatpush1.bf16.msra.mxu0 0
    %778 = vmatprep.subr.bf16.mxu0 0
    %779 = vmatpush1.bf16.msra.mxu0 0
    %780 = vmatprep.subr.bf16.mxu0 0
    %781 = vmatpush1.bf16.msra.mxu0 0
    %782 = vmatprep.subr.bf16.mxu0 0
    %783 = vmatpush1.bf16.msra.mxu0 0
    %784 = vmatprep.subr.bf16.mxu0 0
    %785 = vmatpush1.bf16.msra.mxu0 0
    %786 = vmatprep.subr.bf16.mxu0 0
    %787 = vmatpush1.bf16.msra.mxu0 0
    %788 = vmatprep.subr.bf16.mxu0 0
    %789 = vmatpush1.bf16.msra.mxu0 0
    %790 = vmatprep.subr.bf16.mxu0 0
    %791 = vmatpush1.bf16.msra.mxu0 0
    %792 = vmatprep.subr.bf16.mxu0 0
    %793 = vmatpush1.bf16.msra.mxu0 0
    %794 = vmatprep.subr.bf16.mxu0 0
    %795 = vmatpush1.bf16.msra.mxu0 0
    %796 = vmatprep.mubr.bf16.mxu0 0
    %797 = vmatmul.mubr.bf16.gmra.mrb[0].mxu0 %v705
    %v798 = vpop.f32.mrb[0].mxu0
    %v799 = vadd.f32 %v701, %v798
    %v800 = vpop.f32.mrb[0].mxu0
    %v801 = vadd.f32 %v701, %v800
    %v802 = vpop.f32.mrb[0].mxu0
    %v803 = vpop.f32.mrb[0].mxu0
    %804 = vdwg.mxu0
    %v805 = vmax.f32 %v758, 0.0
    %v806 = vmax.f32 %v760, 0.0
    %v807 = vmax.f32 %v799, 0.0
    %v808 = vmax.f32 %v801, 0.0
    %813 = vrot.lane.b32.xlu0 %v805, 127
    %v814 = vpop.permute.xlu0 %813
    %815 = vrot.lane.b32.xlu0 %v806, 127
    %v816 = vpop.permute.xlu0 %815
    %817 = vrot.lane.b32.xlu0 %v807, 127
    %v818 = vpop.permute.xlu0 %817
    %819 = vrot.lane.b32.xlu0 %v808, 127
    %v820 = vpop.permute.xlu0 %819
    %v821 = vsel %vm388, %v814, %v816
    %v822 = vsel %vm388, %v816, %v818
    %v823 = vsel %vm388, %v818, %v820
    %v828 = vsel %vm388, %v820, 0.0
    %v829 = vmax.f32 %v805, %v821
    %v830 = vmax.f32 %v806, %v822
    %v831 = vmax.f32 %v807, %v823
    %v832 = vmax.f32 %v808, %v828
    %833 = vrot.lane.b32.xlu0 %v805, 112
    %v834 = vpop.permute.xlu0 %833
    %835 = vrot.lane.b32.xlu0 %v806, 112
    %v836 = vpop.permute.xlu0 %835
    %837 = vrot.lane.b32.xlu0 %v807, 112
    %v838 = vpop.permute.xlu0 %837
    %839 = vrot.lane.b32.xlu0 %v808, 112
    %v840 = vpop.permute.xlu0 %839
    %v841 = vsel %vm540, %v834, %v836
    %v842 = vsel %vm540, %v836, %v838
    %v843 = vsel %vm540, %v838, %v840
    %v848 = vsel %vm540, %v840, 0.0
    %849 = vrot.lane.b32.xlu0 %v805, 111
    %v850 = vpop.permute.xlu0 %849
    %851 = vrot.lane.b32.xlu0 %v806, 111
    %v852 = vpop.permute.xlu0 %851
    %853 = vrot.lane.b32.xlu0 %v807, 111
    %v854 = vpop.permute.xlu0 %853
    %855 = vrot.lane.b32.xlu0 %v808, 111
    %v856 = vpop.permute.xlu0 %855
    %v857 = vsel %vm616, %v850, %v852
    %v858 = vsel %vm616, %v852, %v854
    %v859 = vsel %vm616, %v854, %v856
    %v864 = vsel %vm616, %v856, 0.0
    %v865 = vmax.f32 %v841, %v857
    %v866 = vmax.f32 %v842, %v858
    %v867 = vmax.f32 %v843, %v859
    %v868 = vmax.f32 %v848, %v864
    %v869 = vmax.f32 %v829, %v865
    %v870 = vmax.f32 %v830, %v866
    %v871 = vmax.f32 %v831, %v867
    %v872 = vmax.f32 %v832, %v868
    %v873 = vpack.c.bf16 %v869, %v869
    %v874 = vpack.c.bf16 %v870, %v870
    %v875 = vpack.c.bf16 %v871, %v871
    %v876 = vpack.c.bf16 %v872, %v872
    %v877 = vld [vmem:[%s3] sm:$0xf]
    %v878 = vld [vmem:[%s3 + $0x4] sm:$0xf]
    %v879 = vld [vmem:[%s3 + $0x8] sm:$0xf]
    %v880 = vld [vmem:[%s3 + $0xc] sm:$0xf]
    %v881 = vld [vmem:[%s3 + $0x10] sm:$0xf]
    %v882 = vld [vmem:[%s3 + $0x14] sm:$0xf]
    %v883 = vld [vmem:[%s3 + $0x18] sm:$0xf]
    %v884 = vld [vmem:[%s3 + $0x1c] sm:$0xf]
    %v885 = vld [vmem:[%s3 + $0x20] sm:$0xf]
    %v886 = vld [vmem:[%s3 + $0x24] sm:$0xf]
    %v887 = vld [vmem:[%s3 + $0x28] sm:$0xf]
    %v888 = vld [vmem:[%s3 + $0x2c] sm:$0xf]
    %v889 = vld [vmem:[%s3 + $0x30] sm:$0xf]
    %v890 = vld [vmem:[%s3 + $0x34] sm:$0xf]
    %v891 = vld [vmem:[%s3 + $0x38] sm:$0xf]
    %v892 = vld [vmem:[%s3 + $0x3c] sm:$0xf]
    %v893 = vld [vmem:[%s3 + $0x40] sm:$0xf]
    %v894 = vld [vmem:[%s3 + $0x44] sm:$0xf]
    %v895 = vld [vmem:[%s3 + $0x48] sm:$0xf]
    %v896 = vld [vmem:[%s3 + $0x4c] sm:$0xf]
    %v897 = vld [vmem:[%s3 + $0x50] sm:$0xf]
    %v898 = vld [vmem:[%s3 + $0x54] sm:$0xf]
    %v899 = vld [vmem:[%s3 + $0x58] sm:$0xf]
    %v900 = vld [vmem:[%s3 + $0x5c] sm:$0xf]
    %v901 = vld [vmem:[%s3 + $0x60] sm:$0xf]
    %v902 = vld [vmem:[%s3 + $0x64] sm:$0xf]
    %v903 = vld [vmem:[%s3 + $0x68] sm:$0xf]
    %v904 = vld [vmem:[%s3 + $0x6c] sm:$0xf]
    %v905 = vld [vmem:[%s3 + $0x70] sm:$0xf]
    %v906 = vld [vmem:[%s3 + $0x74] sm:$0xf]
    %v907 = vld [vmem:[%s3 + $0x78] sm:$0xf]
    %v908 = vld [vmem:[%s3 + $0x7c] sm:$0xf]
    %v909 = vld [vmem:[%s3 + $0x80] sm:$0xf]
    %v910 = vld [vmem:[%s3 + $0x84] sm:$0xf]
    %v911 = vld [vmem:[%s3 + $0x88] sm:$0xf]
    %v912 = vld [vmem:[%s3 + $0x8c] sm:$0xf]
    %v913 = vld [vmem:[%s3 + $0x90] sm:$0xf]
    %v914 = vld [vmem:[%s3 + $0x94] sm:$0xf]
    %v915 = vld [vmem:[%s3 + $0x98] sm:$0xf]
    %v916 = vld [vmem:[%s3 + $0x9c] sm:$0xf]
    %v917 = vld [vmem:[%s3 + $0xa0] sm:$0xf]
    %v918 = vld [vmem:[%s3 + $0xa4] sm:$0xf]
    %v919 = vld [vmem:[%s3 + $0xa8] sm:$0xf]
    %v920 = vld [vmem:[%s3 + $0xac] sm:$0xf]
    %v921 = vld [vmem:[%s3 + $0xb0] sm:$0xf]
    %v922 = vld [vmem:[%s3 + $0xb4] sm:$0xf]
    %v923 = vld [vmem:[%s3 + $0xb8] sm:$0xf]
    %v924 = vld [vmem:[%s3 + $0xbc] sm:$0xf]
    %v925 = vld [vmem:[%s3 + $0xc0] sm:$0xf]
    %v926 = vld [vmem:[%s3 + $0xc4] sm:$0xf]
    %v927 = vld [vmem:[%s3 + $0xc8] sm:$0xf]
    %v928 = vld [vmem:[%s3 + $0xcc] sm:$0xf]
    %v929 = vld [vmem:[%s3 + $0xd0] sm:$0xf]
    %v930 = vld [vmem:[%s3 + $0xd4] sm:$0xf]
    %v931 = vld [vmem:[%s3 + $0xd8] sm:$0xf]
    %v932 = vld [vmem:[%s3 + $0xdc] sm:$0xf]
    %v933 = vld [vmem:[%s3 + $0xe0] sm:$0xf]
    %v934 = vld [vmem:[%s3 + $0xe4] sm:$0xf]
    %v935 = vld [vmem:[%s3 + $0xe8] sm:$0xf]
    %v936 = vld [vmem:[%s3 + $0xec] sm:$0xf]
    %v937 = vld [vmem:[%s3 + $0xf0] sm:$0xf]
    %v938 = vld [vmem:[%s3 + $0xf4] sm:$0xf]
    %v939 = vld [vmem:[%s3 + $0xf8] sm:$0xf]
    %v940 = vld [vmem:[%s3 + $0xfc] sm:$0xf]
    %v1005 = vunpack.c.l.b16 %v877
    %v1006 = vunpack.c.l.b16 %v878
    %v1007 = vunpack.c.l.b16 %v879
    %v1008 = vunpack.c.l.b16 %v880
    %v1009 = vunpack.c.l.b16 %v881
    %v1010 = vunpack.c.l.b16 %v882
    %v1011 = vunpack.c.l.b16 %v883
    %v1012 = vunpack.c.l.b16 %v884
    %v1013 = vunpack.c.l.b16 %v885
    %v1014 = vunpack.c.l.b16 %v886
    %v1015 = vunpack.c.l.b16 %v887
    %v1016 = vunpack.c.l.b16 %v888
    %v1017 = vunpack.c.l.b16 %v889
    %v1018 = vunpack.c.l.b16 %v890
    %v1019 = vunpack.c.l.b16 %v891
    %v1020 = vunpack.c.l.b16 %v892
    %v1021 = vunpack.c.l.b16 %v893
    %v1022 = vunpack.c.l.b16 %v894
    %v1023 = vunpack.c.l.b16 %v895
    %v1024 = vunpack.c.l.b16 %v896
    %v1025 = vunpack.c.l.b16 %v897
    %v1026 = vunpack.c.l.b16 %v898
    %v1027 = vunpack.c.l.b16 %v899
    %v1028 = vunpack.c.l.b16 %v900
    %v1029 = vunpack.c.l.b16 %v901
    %v1030 = vunpack.c.l.b16 %v902
    %v1031 = vunpack.c.l.b16 %v903
    %v1032 = vunpack.c.l.b16 %v904
    %v1033 = vunpack.c.l.b16 %v905
    %v1034 = vunpack.c.l.b16 %v906
    %v1035 = vunpack.c.l.b16 %v907
    %v1036 = vunpack.c.l.b16 %v908
    %v1037 = vunpack.c.l.b16 %v909
    %v1038 = vunpack.c.l.b16 %v910
    %v1039 = vunpack.c.l.b16 %v911
    %v1040 = vunpack.c.l.b16 %v912
    %v1041 = vunpack.c.l.b16 %v913
    %v1042 = vunpack.c.l.b16 %v914
    %v1043 = vunpack.c.l.b16 %v915
    %v1044 = vunpack.c.l.b16 %v916
    %v1045 = vunpack.c.l.b16 %v917
    %v1046 = vunpack.c.l.b16 %v918
    %v1047 = vunpack.c.l.b16 %v919
    %v1048 = vunpack.c.l.b16 %v920
    %v1049 = vunpack.c.l.b16 %v921
    %v1050 = vunpack.c.l.b16 %v922
    %v1051 = vunpack.c.l.b16 %v923
    %v1052 = vunpack.c.l.b16 %v924
    %v1053 = vunpack.c.l.b16 %v925
    %v1054 = vunpack.c.l.b16 %v926
    %v1055 = vunpack.c.l.b16 %v927
    %v1056 = vunpack.c.l.b16 %v928
    %v1057 = vunpack.c.l.b16 %v929
    %v1058 = vunpack.c.l.b16 %v930
    %v1059 = vunpack.c.l.b16 %v931
    %v1060 = vunpack.c.l.b16 %v932
    %v1061 = vunpack.c.l.b16 %v933
    %v1062 = vunpack.c.l.b16 %v934
    %v1063 = vunpack.c.l.b16 %v935
    %v1064 = vunpack.c.l.b16 %v936
    %v1065 = vunpack.c.l.b16 %v937
    %v1066 = vunpack.c.l.b16 %v938
    %v1067 = vunpack.c.l.b16 %v939
    %v1068 = vunpack.c.l.b16 %v940
    %v1069 = vpack.c.b16 %v1006, %v1005
    %v1070 = vpack.c.b16 %v1008, %v1007
    %v1071 = vpack.c.b16 %v1010, %v1009
    %v1072 = vpack.c.b16 %v1012, %v1011
    %v1073 = vpack.c.b16 %v1014, %v1013
    %v1074 = vpack.c.b16 %v1016, %v1015
    %v1075 = vpack.c.b16 %v1018, %v1017
    %v1076 = vpack.c.b16 %v1020, %v1019
    %v1077 = vpack.c.b16 %v1022, %v1021
    %v1078 = vpack.c.b16 %v1024, %v1023
    %v1079 = vpack.c.b16 %v1026, %v1025
    %v1080 = vpack.c.b16 %v1028, %v1027
    %v1081 = vpack.c.b16 %v1030, %v1029
    %v1082 = vpack.c.b16 %v1032, %v1031
    %v1083 = vpack.c.b16 %v1034, %v1033
    %v1084 = vpack.c.b16 %v1036, %v1035
    %v1085 = vpack.c.b16 %v1038, %v1037
    %v1086 = vpack.c.b16 %v1040, %v1039
    %v1087 = vpack.c.b16 %v1042, %v1041
    %v1088 = vpack.c.b16 %v1044, %v1043
    %v1089 = vpack.c.b16 %v1046, %v1045
    %v1090 = vpack.c.b16 %v1048, %v1047
    %v1091 = vpack.c.b16 %v1050, %v1049
    %v1092 = vpack.c.b16 %v1052, %v1051
    %v1093 = vpack.c.b16 %v1054, %v1053
    %v1094 = vpack.c.b16 %v1056, %v1055
    %v1095 = vpack.c.b16 %v1058, %v1057
    %v1096 = vpack.c.b16 %v1060, %v1059
    %v1097 = vpack.c.b16 %v1062, %v1061
    %v1098 = vpack.c.b16 %v1064, %v1063
    %v1099 = vpack.c.b16 %v1066, %v1065
    %v1100 = vpack.c.b16 %v1068, %v1067
    %1133 = vmatprep.subr.bf16.mxu0 0
    %1134 = vmatpush1.bf16.msra.mxu0 %v1069
    %1135 = vmatprep.subr.bf16.mxu0 0
    %1136 = vmatpush1.bf16.msra.mxu0 %v1070
    %1137 = vmatprep.subr.bf16.mxu0 0
    %1138 = vmatpush1.bf16.msra.mxu0 %v1071
    %1139 = vmatprep.subr.bf16.mxu0 0
    %1140 = vmatpush1.bf16.msra.mxu0 %v1072
    %1141 = vmatprep.subr.bf16.mxu0 0
    %1142 = vmatpush1.bf16.msra.mxu0 %v1073
    %1143 = vmatprep.subr.bf16.mxu0 0
    %1144 = vmatpush1.bf16.msra.mxu0 %v1074
    %1145 = vmatprep.subr.bf16.mxu0 0
    %1146 = vmatpush1.bf16.msra.mxu0 %v1075
    %1147 = vmatprep.subr.bf16.mxu0 0
    %1148 = vmatpush1.bf16.msra.mxu0 %v1076
    %1149 = vmatprep.subr.bf16.mxu0 0
    %1150 = vmatpush1.bf16.msra.mxu0 %v1077
    %1151 = vmatprep.subr.bf16.mxu0 0
    %1152 = vmatpush1.bf16.msra.mxu0 %v1078
    %1153 = vmatprep.subr.bf16.mxu0 0
    %1154 = vmatpush1.bf16.msra.mxu0 %v1079
    %1155 = vmatprep.subr.bf16.mxu0 0
    %1156 = vmatpush1.bf16.msra.mxu0 %v1080
    %1157 = vmatprep.subr.bf16.mxu0 0
    %1158 = vmatpush1.bf16.msra.mxu0 %v1081
    %1159 = vmatprep.subr.bf16.mxu0 0
    %1160 = vmatpush1.bf16.msra.mxu0 %v1082
    %1161 = vmatprep.subr.bf16.mxu0 0
    %1162 = vmatpush1.bf16.msra.mxu0 %v1083
    %1163 = vmatprep.subr.bf16.mxu0 0
    %1164 = vmatpush1.bf16.msra.mxu0 %v1084
    %1165 = vmatprep.mubr.bf16.mxu0 %v874
    %1166 = vmatmul.mubr.bf16.gmra.mrb[0].mxu0 %v873
    %v1167 = vpop.f32.mrb[0].mxu0
    %v1168 = vadd.f32 0.0, %v1167
    %v1169 = vpop.f32.mrb[0].mxu0
    %v1170 = vpop.f32.mrb[0].mxu0
    %v1171 = vpop.f32.mrb[0].mxu0
    %1172 = vdwg.mxu0
    %1173 = vmatprep.subr.bf16.mxu0 0
    %1174 = vmatpush1.bf16.msra.mxu0 %v1085
    %1175 = vmatprep.subr.bf16.mxu0 0
    %1176 = vmatpush1.bf16.msra.mxu0 %v1086
    %1177 = vmatprep.subr.bf16.mxu0 0
    %1178 = vmatpush1.bf16.msra.mxu0 %v1087
    %1179 = vmatprep.subr.bf16.mxu0 0
    %1180 = vmatpush1.bf16.msra.mxu0 %v1088
    %1181 = vmatprep.subr.bf16.mxu0 0
    %1182 = vmatpush1.bf16.msra.mxu0 %v1089
    %1183 = vmatprep.subr.bf16.mxu0 0
    %1184 = vmatpush1.bf16.msra.mxu0 %v1090
    %1185 = vmatprep.subr.bf16.mxu0 0
    %1186 = vmatpush1.bf16.msra.mxu0 %v1091
    %1187 = vmatprep.subr.bf16.mxu0 0
    %1188 = vmatpush1.bf16.msra.mxu0 %v1092
    %1189 = vmatprep.subr.bf16.mxu0 0
    %1190 = vmatpush1.bf16.msra.mxu0 %v1093
    %1191 = vmatprep.subr.bf16.mxu0 0
    %1192 = vmatpush1.bf16.msra.mxu0 %v1094
    %1193 = vmatprep.subr.bf16.mxu0 0
    %1194 = vmatpush1.bf16.msra.mxu0 %v1095
    %1195 = vmatprep.subr.bf16.mxu0 0
    %1196 = vmatpush1.bf16.msra.mxu0 %v1096
    %1197 = vmatprep.subr.bf16.mxu0 0
    %1198 = vmatpush1.bf16.msra.mxu0 %v1097
    %1199 = vmatprep.subr.bf16.mxu0 0
    %1200 = vmatpush1.bf16.msra.mxu0 %v1098
    %1201 = vmatprep.subr.bf16.mxu0 0
    %1202 = vmatpush1.bf16.msra.mxu0 %v1099
    %1203 = vmatprep.subr.bf16.mxu0 0
    %1204 = vmatpush1.bf16.msra.mxu0 %v1100
    %1205 = vmatprep.mubr.bf16.mxu0 %v876
    %1206 = vmatmul.mubr.bf16.gmra.mrb[0].mxu0 %v875
    %v1207 = vpop.f32.mrb[0].mxu0
    %v1208 = vadd.f32 %v1168, %v1207
    %v1209 = vpop.f32.mrb[0].mxu0
    %v1210 = vpop.f32.mrb[0].mxu0
    %v1211 = vpop.f32.mrb[0].mxu0
    %1212 = vdwg.mxu0
    %1214 = vrot.lane.b32.xlu0 %v1208, 9
    %v1215 = vpop.permute.xlu0 %1214
    %v1217 = vsel %vm703, 0.0, %v1215
    %v1218 = vld [vmem:[%s2] sm:$0xff]
    %v1219 = vmul.f32 %v1217, %v1218
    %1220 = vst [vmem:[#allocation3] sm:$0xff] %v1219
    %1221 = vrot.lane.b32.xlu0 %v1208, 8
    %v1222 = vpop.permute.xlu0 %1221
    %vm1224 = vcmask 64512
    %v1225 = vsel %vm1224, 0.0, %v1222
    %v1226 = vld [vmem:[%s2 + $0x8] sm:$0xff]
    %v1227 = vmul.f32 %v1225, %v1226
    %1228 = vst [vmem:[#allocation3 + $0x8] sm:$0xff] %v1227
    %1229 = vrot.lane.b32.xlu0 %v1208, 7
    %v1230 = vpop.permute.xlu0 %1229
    %vm1232 = vcmask 56320
    %v1233 = vsel %vm1232, 0.0, %v1230
    %v1234 = vld [vmem:[%s2 + $0x10] sm:$0xff]
    %v1235 = vmul.f32 %v1233, %v1234
    %1236 = vst [vmem:[#allocation3 + $0x10] sm:$0xff] %v1235
    %1237 = vrot.lane.b32.xlu0 %v1208, 1
    %v1238 = vpop.permute.xlu0 %1237
    %v1240 = vsel %vm306, 0.0, %v1238
    %v1241 = vld [vmem:[%s2 + $0x18] sm:$0xff]
    %v1242 = vmul.f32 %v1240, %v1241
    %1243 = vst [vmem:[#allocation3 + $0x18] sm:$0xff] %v1242
    %v1244 = vld [vmem:[%s2 + $0x20] sm:$0xff]
    %v1245 = vmul.f32 %v1208, %v1244
    %1246 = vst [vmem:[#allocation3 + $0x20] sm:$0xff] %v1245
    %1247 = vrot.lane.b32.xlu0 %v1208, 127
    %v1248 = vpop.permute.xlu0 %1247
    %v1250 = vsel %vm388, %v1248, 0.0
    %v1251 = vld [vmem:[%s2 + $0x28] sm:$0xff]
    %v1252 = vmul.f32 %v1250, %v1251
    %1253 = vst [vmem:[#allocation3 + $0x28] sm:$0xff] %v1252
    %1254 = vrot.lane.b32.xlu0 %v1208, 121
    %v1255 = vpop.permute.xlu0 %1254
    %vm1257 = vcmask 990208
    %v1258 = vsel %vm1257, %v1255, 0.0
    %v1259 = vld [vmem:[%s2 + $0x30] sm:$0xff]
    %v1260 = vmul.f32 %v1258, %v1259
    %1261 = vst [vmem:[#allocation3 + $0x30] sm:$0xff] %v1260
    %1262 = vrot.lane.b32.xlu0 %v1208, 120
    %v1263 = vpop.permute.xlu0 %1262
    %vm1265 = vcmask 982016
    %v1266 = vsel %vm1265, %v1263, 0.0
    %v1267 = vld [vmem:[%s2 + $0x38] sm:$0xff]
    %v1268 = vmul.f32 %v1266, %v1267
    %1269 = vst [vmem:[#allocation3 + $0x38] sm:$0xff] %v1268
    %1270 = vrot.lane.b32.xlu0 %v1208, 119
    %v1271 = vpop.permute.xlu0 %1270
    %vm1273 = vcmask 973824
    %v1274 = vsel %vm1273, %v1271, 0.0
    %v1275 = vld [vmem:[%s2 + $0x40] sm:$0xff]
    %v1276 = vmul.f32 %v1274, %v1275
    %1277 = vst [vmem:[#allocation3 + $0x40] sm:$0xff] %v1276
    %v1278 = vld [vmem:[%s7] sm:$0xf]
    %v1279 = vld [vmem:[#allocation3] sm:$0xff]
    %v1280 = vld [vmem:[#allocation3 + $0x8] sm:$0xff]
    %v1281 = vld [vmem:[#allocation3 + $0x10] sm:$0xff]
    %v1282 = vld [vmem:[#allocation3 + $0x18] sm:$0xff]
    %v1283 = vld [vmem:[#allocation3 + $0x20] sm:$0xff]
    %v1284 = vld [vmem:[#allocation3 + $0x28] sm:$0xff]
    %v1285 = vld [vmem:[#allocation3 + $0x30] sm:$0xff]
    %v1286 = vld [vmem:[#allocation3 + $0x38] sm:$0xff]
    %v1287 = vld [vmem:[#allocation3 + $0x40] sm:$0xff]
    %v1288 = vpack.c.bf16 %v1280, %v1279
    %v1289 = vpack.c.bf16 %v1282, %v1281
    %v1290 = vpack.c.bf16 %v1284, %v1283
    %v1291 = vpack.c.bf16 %v1286, %v1285
    %v1292 = vpack.c.bf16 %v1287, %v1287
    %v1293 = vld [vmem:[%s8] sm:$0xff]
    %1295 = vset.pattern.permute.xlu0 0
    %1296 = vperm.xlu0 %1295, %v1293
    %v1297 = vpop.permute.xlu0 %1296
    %vm1299 = vcmask 588800
    %v1301 = vsel %vm1299, %v1278, 0
    %v1304 = vsel %vm707, %v1292, 0
    %1306 = vmatprep.subr.bf16.mxu0 0
    %1307 = vmatpush1.bf16.msra.mxu0 %v1288
    %1308 = vmatprep.subr.bf16.mxu0 0
    %1309 = vmatpush1.bf16.msra.mxu0 %v1289
    %1310 = vmatprep.subr.bf16.mxu0 0
    %1311 = vmatpush1.bf16.msra.mxu0 %v1290
    %1312 = vmatprep.subr.bf16.mxu0 0
    %1313 = vmatpush1.bf16.msra.mxu0 %v1291
    %1314 = vmatprep.subr.bf16.mxu0 0
    %1315 = vmatpush1.bf16.msra.mxu0 %v1304
    %1316 = vmatprep.subr.bf16.mxu0 0
    %1317 = vmatpush1.bf16.msra.mxu0 0
    %1318 = vmatprep.subr.bf16.mxu0 0
    %1319 = vmatpush1.bf16.msra.mxu0 0
    %1320 = vmatprep.subr.bf16.mxu0 0
    %1321 = vmatpush1.bf16.msra.mxu0 0
    %1322 = vmatprep.subr.bf16.mxu0 0
    %1323 = vmatpush1.bf16.msra.mxu0 0
    %1324 = vmatprep.subr.bf16.mxu0 0
    %1325 = vmatpush1.bf16.msra.mxu0 0
    %1326 = vmatprep.subr.bf16.mxu0 0
    %1327 = vmatpush1.bf16.msra.mxu0 0
    %1328 = vmatprep.subr.bf16.mxu0 0
    %1329 = vmatpush1.bf16.msra.mxu0 0
    %1330 = vmatprep.subr.bf16.mxu0 0
    %1331 = vmatpush1.bf16.msra.mxu0 0
    %1332 = vmatprep.subr.bf16.mxu0 0
    %1333 = vmatpush1.bf16.msra.mxu0 0
    %1334 = vmatprep.subr.bf16.mxu0 0
    %1335 = vmatpush1.bf16.msra.mxu0 0
    %1336 = vmatprep.subr.bf16.mxu0 0
    %1337 = vmatpush1.bf16.msra.mxu0 0
    %1338 = vmatprep.mubr.bf16.mxu0 0
    %1339 = vmatmul.mubr.bf16.gmra.mrb[0].mxu0 %v1301
    %v1340 = vpop.f32.mrb[0].mxu0
    %v1341 = vadd.f32 %v1297, %v1340
    %v1342 = vpop.f32.mrb[0].mxu0
    %v1343 = vpop.f32.mrb[0].mxu0
    %v1344 = vpop.f32.mrb[0].mxu0
    %1345 = vdwg.mxu0
    %v1346 = vmax.f32 %v1341, 0.0
    %1348 = vrot.lane.b32.xlu0 %v1346, 9
    %v1349 = vpop.permute.xlu0 %1348
    %v1351 = vsel %vm703, 0.0, %v1349
    %v1352 = vld [vmem:[%s2] sm:$0xff]
    %v1353 = vmul.f32 %v1351, %v1352
    %1354 = vst [vmem:[#allocation3] sm:$0xff] %v1353
    %1355 = vrot.lane.b32.xlu0 %v1346, 8
    %v1356 = vpop.permute.xlu0 %1355
    %v1358 = vsel %vm1224, 0.0, %v1356
    %v1359 = vld [vmem:[%s2 + $0x8] sm:$0xff]
    %v1360 = vmul.f32 %v1358, %v1359
    %1361 = vst [vmem:[#allocation3 + $0x8] sm:$0xff] %v1360
    %1362 = vrot.lane.b32.xlu0 %v1346, 7
    %v1363 = vpop.permute.xlu0 %1362
    %v1365 = vsel %vm1232, 0.0, %v1363
    %v1366 = vld [vmem:[%s2 + $0x10] sm:$0xff]
    %v1367 = vmul.f32 %v1365, %v1366
    %1368 = vst [vmem:[#allocation3 + $0x10] sm:$0xff] %v1367
    %1369 = vrot.lane.b32.xlu0 %v1346, 1
    %v1370 = vpop.permute.xlu0 %1369
    %v1372 = vsel %vm306, 0.0, %v1370
    %v1373 = vld [vmem:[%s2 + $0x18] sm:$0xff]
    %v1374 = vmul.f32 %v1372, %v1373
    %1375 = vst [vmem:[#allocation3 + $0x18] sm:$0xff] %v1374
    %v1376 = vld [vmem:[%s2 + $0x20] sm:$0xff]
    %v1377 = vmul.f32 %v1346, %v1376
    %1378 = vst [vmem:[#allocation3 + $0x20] sm:$0xff] %v1377
    %1379 = vrot.lane.b32.xlu0 %v1346, 127
    %v1380 = vpop.permute.xlu0 %1379
    %v1382 = vsel %vm388, %v1380, 0.0
    %v1383 = vld [vmem:[%s2 + $0x28] sm:$0xff]
    %v1384 = vmul.f32 %v1382, %v1383
    %1385 = vst [vmem:[#allocation3 + $0x28] sm:$0xff] %v1384
    %1386 = vrot.lane.b32.xlu0 %v1346, 121
    %v1387 = vpop.permute.xlu0 %1386
    %v1389 = vsel %vm1257, %v1387, 0.0
    %v1390 = vld [vmem:[%s2 + $0x30] sm:$0xff]
    %v1391 = vmul.f32 %v1389, %v1390
    %1392 = vst [vmem:[#allocation3 + $0x30] sm:$0xff] %v1391
    %1393 = vrot.lane.b32.xlu0 %v1346, 120
    %v1394 = vpop.permute.xlu0 %1393
    %v1396 = vsel %vm1265, %v1394, 0.0
    %v1397 = vld [vmem:[%s2 + $0x38] sm:$0xff]
    %v1398 = vmul.f32 %v1396, %v1397
    %1399 = vst [vmem:[#allocation3 + $0x38] sm:$0xff] %v1398
    %1400 = vrot.lane.b32.xlu0 %v1346, 119
    %v1401 = vpop.permute.xlu0 %1400
    %v1403 = vsel %vm1273, %v1401, 0.0
    %v1404 = vld [vmem:[%s2 + $0x40] sm:$0xff]
    %v1405 = vmul.f32 %v1403, %v1404
    %1406 = vst [vmem:[#allocation3 + $0x40] sm:$0xff] %v1405
    %v1407 = vld [vmem:[%s9] sm:$0xf]
    %v1408 = vld [vmem:[#allocation3] sm:$0xff]
    %v1409 = vld [vmem:[#allocation3 + $0x8] sm:$0xff]
    %v1410 = vld [vmem:[#allocation3 + $0x10] sm:$0xff]
    %v1411 = vld [vmem:[#allocation3 + $0x18] sm:$0xff]
    %v1412 = vld [vmem:[#allocation3 + $0x20] sm:$0xff]
    %v1413 = vld [vmem:[#allocation3 + $0x28] sm:$0xff]
    %v1414 = vld [vmem:[#allocation3 + $0x30] sm:$0xff]
    %v1415 = vld [vmem:[#allocation3 + $0x38] sm:$0xff]
    %v1416 = vld [vmem:[#allocation3 + $0x40] sm:$0xff]
    %v1417 = vpack.c.bf16 %v1409, %v1408
    %v1418 = vpack.c.bf16 %v1411, %v1410
    %v1419 = vpack.c.bf16 %v1413, %v1412
    %v1420 = vpack.c.bf16 %v1415, %v1414
    %v1421 = vpack.c.bf16 %v1416, %v1416
    %v1422 = vld [vmem:[%s10] sm:$0xff]
    %1424 = vset.pattern.permute.xlu0 0
    %1425 = vperm.xlu0 %1424, %v1422
    %v1426 = vpop.permute.xlu0 %1425
    %v1429 = vsel %vm1299, %v1407, 0
    %v1432 = vsel %vm707, %v1421, 0
    %1434 = vmatprep.subr.bf16.mxu0 0
    %1435 = vmatpush1.bf16.msra.mxu0 %v1417
    %1436 = vmatprep.subr.bf16.mxu0 0
    %1437 = vmatpush1.bf16.msra.mxu0 %v1418
    %1438 = vmatprep.subr.bf16.mxu0 0
    %1439 = vmatpush1.bf16.msra.mxu0 %v1419
    %1440 = vmatprep.subr.bf16.mxu0 0
    %1441 = vmatpush1.bf16.msra.mxu0 %v1420
    %1442 = vmatprep.subr.bf16.mxu0 0
    %1443 = vmatpush1.bf16.msra.mxu0 %v1432
    %1444 = vmatprep.subr.bf16.mxu0 0
    %1445 = vmatpush1.bf16.msra.mxu0 0
    %1446 = vmatprep.subr.bf16.mxu0 0
    %1447 = vmatpush1.bf16.msra.mxu0 0
    %1448 = vmatprep.subr.bf16.mxu0 0
    %1449 = vmatpush1.bf16.msra.mxu0 0
    %1450 = vmatprep.subr.bf16.mxu0 0
    %1451 = vmatpush1.bf16.msra.mxu0 0
    %1452 = vmatprep.subr.bf16.mxu0 0
    %1453 = vmatpush1.bf16.msra.mxu0 0
    %1454 = vmatprep.subr.bf16.mxu0 0
    %1455 = vmatpush1.bf16.msra.mxu0 0
    %1456 = vmatprep.subr.bf16.mxu0 0
    %1457 = vmatpush1.bf16.msra.mxu0 0
    %1458 = vmatprep.subr.bf16.mxu0 0
    %1459 = vmatpush1.bf16.msra.mxu0 0
    %1460 = vmatprep.subr.bf16.mxu0 0
    %1461 = vmatpush1.bf16.msra.mxu0 0
    %1462 = vmatprep.subr.bf16.mxu0 0
    %1463 = vmatpush1.bf16.msra.mxu0 0
    %1464 = vmatprep.subr.bf16.mxu0 0
    %1465 = vmatpush1.bf16.msra.mxu0 0
    %1466 = vmatprep.mubr.bf16.mxu0 0
    %1467 = vmatmul.mubr.bf16.gmra.mrb[0].mxu0 %v1429
    %v1468 = vpop.f32.mrb[0].mxu0
    %v1469 = vadd.f32 %v1426, %v1468
    %v1470 = vpop.f32.mrb[0].mxu0
    %v1471 = vpop.f32.mrb[0].mxu0
    %v1472 = vpop.f32.mrb[0].mxu0
    %1473 = vdwg.mxu0
    %v1474 = vadd.f32 %v1469, %v1208
    %v1475 = vmax.f32 %v1474, 0.0
    %1476 = vst [vmem:[%s14] sm:$0xff] %v1475
    %v1477 = vld [vmem:[%s4] sm:$0x3]
    %1478 = vmatprep.subr.mxu0 0.0
    %1479 = vmatpush1.xpose.msra.mxu0 %v1475
    %1480 = vmatprep.subr.mxu0 0.0
    %1481 = vmatpush1.xpose.msra.mxu0 0.0
    %1482 = vmatprep.subr.mxu0 0.0
    %1483 = vmatpush1.xpose.msra.mxu0 0.0
    %1484 = vmatprep.subr.mxu0 0.0
    %1485 = vmatpush1.xpose.msra.mxu0 0.0
    %1486 = vmatprep.subr.mxu0 0.0
    %1487 = vmatpush1.xpose.msra.mxu0 0.0
    %1488 = vmatprep.subr.mxu0 0.0
    %1489 = vmatpush1.xpose.msra.mxu0 0.0
    %1490 = vmatprep.subr.mxu0 0.0
    %1491 = vmatpush1.xpose.msra.mxu0 0.0
    %1492 = vmatprep.subr.mxu0 0.0
    %1493 = vmatpush1.xpose.msra.mxu0 0.0
    %1494 = vmatprep.subr.mxu0 0.0
    %1495 = vmatpush1.xpose.msra.mxu0 0.0
    %1496 = vmatprep.subr.mxu0 0.0
    %1497 = vmatpush1.xpose.msra.mxu0 0.0
    %1498 = vmatprep.subr.mxu0 0.0
    %1499 = vmatpush1.xpose.msra.mxu0 0.0
    %1500 = vmatprep.subr.mxu0 0.0
    %1501 = vmatpush1.xpose.msra.mxu0 0.0
    %1502 = vmatprep.subr.mxu0 0.0
    %1503 = vmatpush1.xpose.msra.mxu0 0.0
    %1504 = vmatprep.subr.mxu0 0.0
    %1505 = vmatpush1.xpose.msra.mxu0 0.0
    %1506 = vmatprep.subr.mxu0 0.0
    %1507 = vmatpush1.xpose.msra.mxu0 0.0
    %1508 = vmatprep.subr.mxu0 0.0
    %1509 = vmatpush1.xpose.msra.mxu0 0.0
    %1510 = vmatprep.subr.mxu0 0.0
    %1511 = vmatpush1.xpose.msra.mxu0 0.0
    %1512 = vmatprep.subr.mxu0 0.0
    %1513 = vmatpush1.xpose.msra.mxu0 0.0
    %1514 = vmatprep.subr.mxu0 0.0
    %1515 = vmatpush1.xpose.msra.mxu0 0.0
    %1516 = vmatprep.subr.mxu0 0.0
    %1517 = vmatpush1.xpose.msra.mxu0 0.0
    %1518 = vmatprep.subr.mxu0 0.0
    %1519 = vmatpush1.xpose.msra.mxu0 0.0
    %1520 = vmatprep.subr.mxu0 0.0
    %1521 = vmatpush1.xpose.msra.mxu0 0.0
    %1522 = vmatprep.subr.mxu0 0.0
    %1523 = vmatpush1.xpose.msra.mxu0 0.0
    %1524 = vmatprep.subr.mxu0 0.0
    %1525 = vmatpush1.xpose.msra.mxu0 0.0
    %1526 = vmatprep.subr.mxu0 0.0
    %1527 = vmatpush1.xpose.msra.mxu0 0.0
    %1528 = vmatprep.subr.mxu0 0.0
    %1529 = vmatpush1.xpose.msra.mxu0 0.0
    %1530 = vmatprep.subr.mxu0 0.0
    %1531 = vmatpush1.xpose.msra.mxu0 0.0
    %1532 = vmatprep.subr.mxu0 0.0
    %1533 = vmatpush1.xpose.msra.mxu0 0.0
    %1534 = vmatprep.subr.mxu0 0.0
    %1535 = vmatpush1.xpose.msra.mxu0 0.0
    %1536 = vmatprep.subr.mxu0 0.0
    %1537 = vmatpush1.xpose.msra.mxu0 0.0
    %1538 = vmatprep.subr.mxu0 0.0
    %1539 = vmatpush1.xpose.msra.mxu0 0.0
    %1540 = vmatprep.subr.mxu0 0.0
    %1541 = vmatpush1.xpose.msra.mxu0 0.0
    %1542 = vmatprep.mubr.f32.mxu0 0.0
    %1543 = vmatmul.mubr.f32.gmra.mrb[0].mxu0 %v1477
    %v1544 = vpop.f32.mrb[0].mxu0
    %v1545 = vadd.f32 0.0, %v1544
    %v1546 = vpop.f32.mrb[0].mxu0
    %1547 = vdwg.mxu0
    %vm1548 = vcmask 58368
    %1549 = vst.msk [vmem:[#allocation6] sm:$0x3] %vm1548, %v1545
    %v1550 = vld [vmem:[%s11] sm:$0xff]
    %v1551 = vld [vmem:[%s12] sm:$0x1]
    %v1553 = vlaneseq
    %v1554 = vshrl.u32 %v1553, 7
    %v1555 = vsub.s32 0, %v1554
    %v1556 = vrot.slane %v1551, %v1555
    %v1559 = vsel %vm1224, %v1545, 0
    %1561 = vmatprep.subr.mxu0 0.0
    %1562 = vmatpush1.msra.mxu0 %v1550
    %1563 = vmatprep.subr.mxu0 0.0
    %1564 = vmatpush1.msra.mxu0 0.0
    %1565 = vmatprep.subr.mxu0 0.0
    %1566 = vmatpush1.msra.mxu0 0.0
    %1567 = vmatprep.subr.mxu0 0.0
    %1568 = vmatpush1.msra.mxu0 0.0
    %1569 = vmatprep.subr.mxu0 0.0
    %1570 = vmatpush1.msra.mxu0 0.0
    %1571 = vmatprep.subr.mxu0 0.0
    %1572 = vmatpush1.msra.mxu0 0.0
    %1573 = vmatprep.subr.mxu0 0.0
    %1574 = vmatpush1.msra.mxu0 0.0
    %1575 = vmatprep.subr.mxu0 0.0
    %1576 = vmatpush1.msra.mxu0 0.0
    %1577 = vmatprep.subr.mxu0 0.0
    %1578 = vmatpush1.msra.mxu0 0.0
    %1579 = vmatprep.subr.mxu0 0.0
    %1580 = vmatpush1.msra.mxu0 0.0
    %1581 = vmatprep.subr.mxu0 0.0
    %1582 = vmatpush1.msra.mxu0 0.0
    %1583 = vmatprep.subr.mxu0 0.0
    %1584 = vmatpush1.msra.mxu0 0.0
    %1585 = vmatprep.subr.mxu0 0.0
    %1586 = vmatpush1.msra.mxu0 0.0
    %1587 = vmatprep.subr.mxu0 0.0
    %1588 = vmatpush1.msra.mxu0 0.0
    %1589 = vmatprep.subr.mxu0 0.0
    %1590 = vmatpush1.msra.mxu0 0.0
    %1591 = vmatprep.subr.mxu0 0.0
    %1592 = vmatpush1.msra.mxu0 0.0
    %1593 = vmatprep.subr.mxu0 0.0
    %1594 = vmatpush1.msra.mxu0 0.0
    %1595 = vmatprep.subr.mxu0 0.0
    %1596 = vmatpush1.msra.mxu0 0.0
    %1597 = vmatprep.subr.mxu0 0.0
    %1598 = vmatpush1.msra.mxu0 0.0
    %1599 = vmatprep.subr.mxu0 0.0
    %1600 = vmatpush1.msra.mxu0 0.0
    %1601 = vmatprep.subr.mxu0 0.0
    %1602 = vmatpush1.msra.mxu0 0.0
    %1603 = vmatprep.subr.mxu0 0.0
    %1604 = vmatpush1.msra.mxu0 0.0
    %1605 = vmatprep.subr.mxu0 0.0
    %1606 = vmatpush1.msra.mxu0 0.0
    %1607 = vmatprep.subr.mxu0 0.0
    %1608 = vmatpush1.msra.mxu0 0.0
    %1609 = vmatprep.subr.mxu0 0.0
    %1610 = vmatpush1.msra.mxu0 0.0
    %1611 = vmatprep.subr.mxu0 0.0
    %1612 = vmatpush1.msra.mxu0 0.0
    %1613 = vmatprep.subr.mxu0 0.0
    %1614 = vmatpush1.msra.mxu0 0.0
    %1615 = vmatprep.subr.mxu0 0.0
    %1616 = vmatpush1.msra.mxu0 0.0
    %1617 = vmatprep.subr.mxu0 0.0
    %1618 = vmatpush1.msra.mxu0 0.0
    %1619 = vmatprep.subr.mxu0 0.0
    %1620 = vmatpush1.msra.mxu0 0.0
    %1621 = vmatprep.subr.mxu0 0.0
    %1622 = vmatpush1.msra.mxu0 0.0
    %1623 = vmatprep.subr.mxu0 0.0
    %1624 = vmatpush1.msra.mxu0 0.0
    %1625 = vmatprep.mubr.f32.mxu0 0.0
    %1626 = vmatmul.mubr.f32.gmra.mrb[0].mxu0 %v1559
    %v1627 = vpop.f32.mrb[0].mxu0
    %v1628 = vadd.f32 %v1556, %v1627
    %v1629 = vpop.f32.mrb[0].mxu0
    %1630 = vdwg.mxu0
    %vm1631 = vcmask 74752
    %1632 = vst.msk [vmem:[#allocation4] sm:$0x3] %vm1631, %v1628
    // Predicated region
    $region54: #{modified_resnet_forward.1} parent=1 // pred_check
      _
    $region55: #{modified_resnet_forward.1} parent=1 // pred_check_branch
      %1634 = sbr.rel (0) target = $region57
    $region56: #{modified_resnet_forward.1} parent=1 // pred_region
      %s1636 = ssub.s32 32, 32
      %1637 = vsyncadd [#allocation5], %s1636
      %s1639 = sshll.u32 [#allocation4], 4
      %s1640 = int_to_ptr.vmem [resolvable:$true] %s1639
      %1642 = dma.vmem_to_hbm [thread:$0]  %s1640, 32, %s13, [#allocation5]
    $region57: #{modified_resnet_forward.1} parent=1 // pred_fallthru
      _
    // Predicated region
    $region58: #{modified_resnet_forward.1} parent=1 // pred_check
      _
    $region59: #{modified_resnet_forward.1} parent=1 // pred_check_branch
      %1644 = sbr.rel (0) target = $region61
    $region60: #{modified_resnet_forward.1} parent=1 // pred_region
      _
    $region61: #{modified_resnet_forward.1} parent=1 // pred_fallthru
      _
    // Predicated region
    $region62: #{modified_resnet_forward.1} parent=1 // pred_check
      _
    $region63: #{modified_resnet_forward.1} parent=1 // pred_check_branch
      %1646 = sbr.rel (0) target = $region65
    $region64: #{modified_resnet_forward.1} parent=1 // pred_region
      %s1648 = ssub.s32 32, 32
      %1649 = vsyncadd [#allocation7], %s1648
      %s1651 = sshll.u32 [#allocation6], 4
      %s1652 = int_to_ptr.vmem [resolvable:$true] %s1651
      %1654 = dma.vmem_to_hbm [thread:$0]  %s1652, 32, %s15, [#allocation7]
    $region65: #{modified_resnet_forward.1} parent=1 // pred_fallthru
      _
    // Predicated region
    $region66: #{modified_resnet_forward.1} parent=1 // pred_check
      _
    $region67: #{modified_resnet_forward.1} parent=1 // pred_check_branch
      %1656 = sbr.rel (0) target = $region69
    $region68: #{modified_resnet_forward.1} parent=1 // pred_region
      %1657 = dma.done [#allocation5], 32
    $region69: #{modified_resnet_forward.1} parent=1 // pred_fallthru
      _
    // Predicated region
    $region70: #{modified_resnet_forward.1} parent=1 // pred_check
      _
    $region71: #{modified_resnet_forward.1} parent=1 // pred_check_branch
      %1659 = sbr.rel (0) target = $region73
    $region72: #{modified_resnet_forward.1} parent=1 // pred_region
      _
    $region73: #{modified_resnet_forward.1} parent=1 // pred_fallthru
      _
    // Predicated region
    $region74: #{modified_resnet_forward.1} parent=1 // pred_check
      _
    $region75: #{modified_resnet_forward.1} parent=1 // pred_check_branch
      %1661 = sbr.rel (0) target = $region77
    $region76: #{modified_resnet_forward.1} parent=1 // pred_region
      %1662 = dma.done [#allocation7], 32
    $region77: #{modified_resnet_forward.1} parent=1 // pred_fallthru
      _
    %1663 = vsyncpa [#allocation5], 1
    %1664 = vsyncpa [#allocation7], 1

</llo_original>
